<compile_context>
chip_gen: v7x
topology: tpu7x:2x2x1
jax: 0.10.0
libtpu: 0.0.40
codegen_flags: <defaults>
</compile_context>

<pallas_src>
import jax
import jax.numpy as jnp
from jax import lax
from jax.experimental import pallas as pl
from jax.experimental.pallas import tpu as pltpu


# ---------------------------------------------------------------------------
# small helpers
# ---------------------------------------------------------------------------
def _round_up(n, m):
    return ((n + m - 1) // m) * m


def _vmem_budget():
    """(chunk_budget_bytes, max_time_chunk, vmem_limit_cap) per TPU generation."""
    try:
        cap = int(getattr(pltpu.get_tpu_info(), "vmem_capacity_bytes", 64 << 20))
    except Exception:
        cap = 64 << 20
    if cap >= (100 << 20):                 # v5e / v6e: 128 MiB physical VMEM
        return 24 << 20, 256, 96 << 20
    return 8 << 20, 64, 48 << 20           # v7x-safe: 64 MiB physical VMEM


# ---------------------------------------------------------------------------
# wrapper: equivalent of RNNBlock.forward  (x: (B, sequenceDim, L) -> hn: (1, B, hidR))
# ---------------------------------------------------------------------------
def rnn_block_forward(x, params, *, max_time_chunk=None):
    B, C, L = x.shape
    H = params["w_hr"].shape[0]

    f32 = jnp.float32
    bf16 = jnp.bfloat16

    Hp = _round_up(H, 128)      # each gate gets a 128-lane-aligned slot
    Gp = 3 * Hp                 # packed gates r|z|n at lane offsets 0 / Hp / 2*Hp

    # ---- batch padding / blocking (leading "parallel" grid axis) -----------
    Bp0 = _round_up(B, 8)
    if Bp0 >= 16:
        # At least 2 batch blocks so v7x's second TensorCore has work; cap the
        # block toward the MXU M dimension.
        Bb = min(_round_up((Bp0 + 1) // 2, 8), 128)
    else:
        Bb = Bp0
    Bp = _round_up(Bp0, Bb)

    # ---- generation-aware time chunking -------------------------------------
    chunk_budget, gen_max_T, vmem_cap = _vmem_budget()
    max_T = gen_max_T if max_time_chunk is None else int(max_time_chunk)
    per_t_bytes = Bb * Gp * 4 + 2 * Bb * C * 2   # xp scratch + double-buffered x chunk
    T = max(1, min(L, max_T, chunk_budget // max(per_t_bytes, 1)))
    n_chunks = (L + T - 1) // T
    Lp = n_chunks * T
    mask_tail = (Lp != L)

    # ---- per-step unroll vs vreg pressure ------------------------------------
    vregs_per_step = 2 * max(Bb // 8, 1) * (Gp // 128)       # live xp + hp values
    if vregs_per_step >= 24:
        unroll = 1
    elif vregs_per_step >= 12:
        unroll = 2
    else:
        unroll = T if T <= 8 else 4

    # ---- pack weights; padded gate/hidden lanes stay exactly zero -----------
    w_i = jnp.zeros((C, Gp), bf16)
    w_i = w_i.at[:, 0:H].set(params["w_ir"].astype(bf16))
    w_i = w_i.at[:, Hp:Hp + H].set(params["w_iz"].astype(bf16))
    w_i = w_i.at[:, 2 * Hp:2 * Hp + H].set(params["w_in"].astype(bf16))

    b_i = jnp.zeros((1, Gp), f32)
    b_i = b_i.at[0, 0:H].set(params["b_ir"] + params["b_hr"])        # r: both biases folded
    b_i = b_i.at[0, Hp:Hp + H].set(params["b_iz"] + params["b_hz"])  # z: both biases folded
    b_i = b_i.at[0, 2 * Hp:2 * Hp + H].set(params["b_in"])           # n: input bias only

    w_h = jnp.zeros((Hp, Gp), bf16)
    w_h = w_h.at[:H, 0:H].set(params["w_hr"].astype(bf16))
    w_h = w_h.at[:H, Hp:Hp + H].set(params["w_hz"].astype(bf16))
    w_h = w_h.at[:H, 2 * Hp:2 * Hp + H].set(params["w_hn"].astype(bf16))

    b_hn = jnp.zeros((1, Hp), f32).at[0, :H].set(params["b_hn"])

    # ---- time-major bf16 input; zero-pad batch (sliced off later) and time ---
    x_tm = jnp.transpose(x, (2, 0, 1)).astype(bf16)                  # (L, B, C)
    if Lp > L or Bp > B:
        x_tm = jnp.pad(x_tm, ((0, Lp - L), (0, Bp - B), (0, 0)))

    # ---- the kernel -----------------------------------------------------------
    def gru_kernel(x_ref, w_i_ref, b_i_ref, w_h_ref, b_hn_ref, h_ref, xp_ref):
        # First time-chunk for this batch block: h0 = 0 (PyTorch GRU default).
        @pl.when(pl.program_id(1) == 0)
        def _init():
            h_ref[...] = jnp.zeros_like(h_ref)

        # Per-chunk input projection (independent of h -> off the serial path,
        # overlaps with the streamed-x pipeline). bf16 operands, f32 accumulate.
        x2d = x_ref[...].reshape(T * Bb, C)
        xp_ref[...] = (
            jnp.dot(x2d, w_i_ref[...], preferred_element_type=jnp.float32)
            + b_i_ref[...]
        )

        # Loop-invariant operands loaded from VMEM once per chunk (keeps the
        # 48 KiB bf16 weight read off the per-step critical path).
        w_hh = w_h_ref[...]            # (Hp, Gp) bf16
        b_hn_v = b_hn_ref[...]         # (1, Hp) f32, broadcasts over Bb rows
        t0 = pl.program_id(1) * T      # global index of this chunk's first step

        def step(t, h):
            i = pl.multiple_of(t * Bb, Bb)
            xp = xp_ref[pl.ds(i, Bb), :]                          # (Bb, Gp) f32
            # Single fused hidden-state matmul per step (bf16 operands, f32 acc).
            hp = jnp.dot(h.astype(bf16), w_hh,
                         preferred_element_type=jnp.float32)      # (Bb, Gp)
            r = jax.nn.sigmoid(xp[:, :Hp] + hp[:, :Hp])
            z = jax.nn.sigmoid(xp[:, Hp:2 * Hp] + hp[:, Hp:2 * Hp])
            n = jnp.tanh(xp[:, 2 * Hp:] + r * (hp[:, 2 * Hp:] + b_hn_v))
            h_new = (1.0 - z) * n + z * h
            if mask_tail:  # static: only generated when L % T != 0
                h_new = jnp.where(t0 + t < L, h_new, h)
            return h_new

        h_ref[...] = lax.fori_loop(0, T, step, h_ref[...], unroll=unroll)

    # ---- VMEM limit sizing -----------------------------------------------------
    bytes_needed = (2 * T * Bb * C * 2                      # double-buffered x chunk (bf16)
                    + T * Bb * Gp * 4                       # xp scratch (f32)
                    + 2 * (C * Gp * 2 + Gp * 4)             # w_i, b_i
                    + 2 * (Hp * Gp * 2 + Hp * 4)            # w_h, b_hn
                    + 2 * Bb * Hp * 4)                      # resident hidden block
    vmem_limit = int(min(max(2 * bytes_needed, 16 << 20), vmem_cap))

    h_pad = pl.pallas_call(
        gru_kernel,
        out_shape=jax.ShapeDtypeStruct((Bp, Hp), f32),
        grid_spec=pltpu.PrefetchScalarGridSpec(
            num_scalar_prefetch=0,
            grid=(Bp // Bb, n_chunks),                       # (batch blocks, time chunks)
            in_specs=[
                pl.BlockSpec((T, Bb, C), lambda b, t: (t, b, 0)),   # raw x time chunk
                pl.BlockSpec((C, Gp), lambda b, t: (0, 0)),         # input weights (bf16)
                pl.BlockSpec((1, Gp), lambda b, t: (0, 0)),         # fused input biases
                pl.BlockSpec((Hp, Gp), lambda b, t: (0, 0)),        # hidden weights (bf16)
                pl.BlockSpec((1, Hp), lambda b, t: (0, 0)),         # b_hn
            ],
            out_specs=pl.BlockSpec((Bb, Hp), lambda b, t: (b, 0)),  # resident hidden state
            scratch_shapes=[pltpu.VMEM((T * Bb, Gp), f32)],         # per-chunk x projection
        ),
        compiler_params=pltpu.CompilerParams(
            dimension_semantics=("parallel", "arbitrary"),
            vmem_limit_bytes=vmem_limit,
        ),
    )(x_tm, w_i, b_i, w_h, b_hn)

    # Strip batch/lane padding; shape matches PyTorch hn: (num_layers=1, B, hidR).
    return h_pad[None, :B, :H]


# ---------------------------------------------------------------------------
# parameter init (mimics PyTorch U(-1/sqrt(H), 1/sqrt(H))) and pure-JAX reference
# ---------------------------------------------------------------------------
def make_params(key, sequenceDim, hidR):
    k = 1.0 / jnp.sqrt(jnp.float32(hidR))
    keys = jax.random.split(key, 12)
    u = lambda kk, shape: jax.random.uniform(kk, shape, jnp.float32, -k, k)
    # Stored transposed relative to PyTorch (we compute x @ W): each (C, H) / (H, H).
    return dict(
        w_ir=u(keys[0], (sequenceDim, hidR)),
        w_iz=u(keys[1], (sequenceDim, hidR)),
        w_in=u(keys[2], (sequenceDim, hidR)),
        w_hr=u(keys[3], (hidR, hidR)),
        w_hz=u(keys[4], (hidR, hidR)),
        w_hn=u(keys[5], (hidR, hidR)),
        b_ir=u(keys[6], (hidR,)),
        b_iz=u(keys[7], (hidR,)),
        b_in=u(keys[8], (hidR,)),
        b_hr=u(keys[9], (hidR,)),
        b_hz=u(keys[10], (hidR,)),
        b_hn=u(keys[11], (hidR,)),
    )


def gru_reference(x, params):
    """Pure-JAX (f32) reference of the same GRU math for validation."""
    B, C, L = x.shape
    H = params["w_hr"].shape[0]
    xs = jnp.transpose(x, (2, 0, 1)).astype(jnp.float32)  # (L, B, C)

    def step(h, x_t):
        r = jax.nn.sigmoid(x_t @ params["w_ir"] + params["b_ir"]
                           + h @ params["w_hr"] + params["b_hr"])
        z = jax.nn.sigmoid(x_t @ params["w_iz"] + params["b_iz"]
                           + h @ params["w_hz"] + params["b_hz"])
        n = jnp.tanh(x_t @ params["w_in"] + params["b_in"]
                     + r * (h @ params["w_hn"] + params["b_hn"]))
        return (1.0 - z) * n + z * h, None

    h0 = jnp.zeros((B, H), dtype=jnp.float32)
    h_final, _ = lax.scan(step, h0, xs)
    return h_final[None, :, :]


if __name__ == "__main__":
    B, sequenceDim, L, hidR = 2, 4, 16, 32

    key = jax.random.PRNGKey(0)
    kx, kp = jax.random.split(key)
    x = jax.random.normal(kx, (B, sequenceDim, L), dtype=jnp.float32)
    params = make_params(kp, sequenceDim, hidR)

    # max_time_chunk=6 -> grid=(1, 3) with a masked tail chunk: exercises the
    # streamed time axis, the resident hidden-state carry and the tail mask.
    hn = rnn_block_forward(x, params, max_time_chunk=6)
    hn = jax.block_until_ready(hn)

    hn_ref = jax.block_until_ready(gru_reference(x, params))
    assert hn.shape == (1, B, hidR)
    # bf16 matmul operands (f32 accumulation) -> slightly looser tolerance vs f32 ref.
    assert jnp.allclose(hn, hn_ref, atol=3e-2, rtol=3e-2), "mismatch vs reference"

    print("KERNEL_OK")
</pallas_src>

<mosaic_0001>
module attributes {stable_mosaic.version = 11 : i64} {
  func.func @gru_kernel(%arg0: i32, %arg1: i32, %arg2: memref<6x8x4xbf16, #tpu.memory_space<vmem>>, %arg3: memref<4x384xbf16, #tpu.memory_space<vmem>>, %arg4: memref<1x384xf32, #tpu.memory_space<vmem>>, %arg5: memref<128x384xbf16, #tpu.memory_space<vmem>>, %arg6: memref<1x128xf32, #tpu.memory_space<vmem>>, %arg7: memref<8x128xf32, #tpu.memory_space<vmem>>, %arg8: memref<48x384xf32, #tpu.memory_space<vmem>>) attributes {dimension_semantics = [#tpu.dimension_semantics<parallel>, #tpu.dimension_semantics<arbitrary>], iteration_bounds = array<i64: 1, 3>, scalar_prefetch = 0 : i64, scratch_operands = 1 : i64, tpu.core_type = #tpu.core_type<tc>, window_params = [{transform_indices = @transform_0, window_bounds = array<i64: 6, 8, 4>}, {pipeline_mode = #tpu.pipeline_mode<synchronous>, transform_indices = @transform_1, window_bounds = array<i64: 4, 384>}, {pipeline_mode = #tpu.pipeline_mode<synchronous>, transform_indices = @transform_2, window_bounds = array<i64: 1, 384>}, {pipeline_mode = #tpu.pipeline_mode<synchronous>, transform_indices = @transform_3, window_bounds = array<i64: 128, 384>}, {pipeline_mode = #tpu.pipeline_mode<synchronous>, transform_indices = @transform_4, window_bounds = array<i64: 1, 128>}, {transform_indices = @transform_5, window_bounds = array<i64: 8, 128>}]} {
    %c0_i32 = arith.constant 0 : i32
    %0 = arith.cmpi eq, %arg1, %c0_i32 : i32
    %1 = arith.extui %0 : i1 to i32
    %c0_i32_0 = arith.constant 0 : i32
    %2 = arith.cmpi ne, %1, %c0_i32_0 : i32
    scf.if %2 {
      %cst_59 = arith.constant 0.000000e+00 : f32
      %238 = vector.broadcast %cst_59 : f32 to vector<8x128xf32>
      %c0_60 = arith.constant 0 : index
      %c0_61 = arith.constant 0 : index
      %239 = vector.load %arg7[%c0_60, %c0_61] : memref<8x128xf32, #tpu.memory_space<vmem>>, vector<8x128xf32>
      tpu.vector_store %arg7[%c0_60, %c0_61], %238 {strides = array<i32>} : memref<8x128xf32, #tpu.memory_space<vmem>>, vector<8x128xf32>,
    } else {
    }
    %c0 = arith.constant 0 : index
    %c0_1 = arith.constant 0 : index
    %c0_2 = arith.constant 0 : index
    %3 = vector.load %arg2[%c0, %c0_1, %c0_2] : memref<6x8x4xbf16, #tpu.memory_space<vmem>>, vector<6x8x4xbf16>
    %4 = vector.shape_cast %3 : vector<6x8x4xbf16> to vector<48x4xbf16>
    %c0_3 = arith.constant 0 : index
    %c0_4 = arith.constant 0 : index
    %5 = vector.load %arg3[%c0_3, %c0_4] : memref<4x384xbf16, #tpu.memory_space<vmem>>, vector<4x384xbf16>
    %cst = arith.constant dense<0.000000e+00> : vector<48x384xf32>
    %6 = tpu.matmul %4, %5, %cst {dimension_numbers = #tpu.dot_dimension_numbers<[1], [0], [0], [1], [0, 0, 1, 1], [], []>} : vector<48x4xbf16>, vector<4x384xbf16>, vector<48x384xf32> -> vector<48x384xf32>
    %c0_5 = arith.constant 0 : index
    %c0_6 = arith.constant 0 : index
    %7 = vector.load %arg4[%c0_5, %c0_6] : memref<1x384xf32, #tpu.memory_space<vmem>>, vector<1x384xf32>
    %8 = vector.broadcast %7 : vector<1x384xf32> to vector<48x384xf32>
    %9 = arith.addf %6, %8 : vector<48x384xf32>
    %c0_7 = arith.constant 0 : index
    %c0_8 = arith.constant 0 : index
    %10 = vector.load %arg8[%c0_7, %c0_8] : memref<48x384xf32, #tpu.memory_space<vmem>>, vector<48x384xf32>
    tpu.vector_store %arg8[%c0_7, %c0_8], %9 {strides = array<i32>} : memref<48x384xf32, #tpu.memory_space<vmem>>, vector<48x384xf32>,
    %c0_9 = arith.constant 0 : index
    %c0_10 = arith.constant 0 : index
    %11 = vector.load %arg5[%c0_9, %c0_10] : memref<128x384xbf16, #tpu.memory_space<vmem>>, vector<128x384xbf16>
    %c0_11 = arith.constant 0 : index
    %c0_12 = arith.constant 0 : index
    %12 = vector.load %arg6[%c0_11, %c0_12] : memref<1x128xf32, #tpu.memory_space<vmem>>, vector<1x128xf32>
    %c6_i32 = arith.constant 6 : i32
    %13 = arith.muli %arg1, %c6_i32 : i32
    %c0_13 = arith.constant 0 : index
    %c0_14 = arith.constant 0 : index
    %14 = vector.load %arg7[%c0_13, %c0_14] : memref<8x128xf32, #tpu.memory_space<vmem>>, vector<8x128xf32>
    %c0_i32_15 = arith.constant 0 : i32
    %c8_i32 = arith.constant 8 : i32
    %15 = arith.muli %c0_i32_15, %c8_i32 : i32
    %16 = tpu.assume_multiple %15, 8 : i32
    %17 = arith.index_cast %16 : i32 to index
    %c0_16 = arith.constant 0 : index
    %18 = vector.load %arg8[%17, %c0_16] : memref<48x384xf32, #tpu.memory_space<vmem>>, vector<8x384xf32>
    %19 = arith.truncf %14 : vector<8x128xf32> to vector<8x128xbf16>
    %cst_17 = arith.constant dense<0.000000e+00> : vector<8x384xf32>
    %20 = tpu.matmul %19, %11, %cst_17 {dimension_numbers = #tpu.dot_dimension_numbers<[1], [0], [0], [1], [0, 0, 1, 1], [], []>} : vector<8x128xbf16>, vector<128x384xbf16>, vector<8x384xf32> -> vector<8x384xf32>
    %21 = vector.extract_strided_slice %18 {offsets = [0, 0], sizes = [8, 128], strides = [1, 1]} : vector<8x384xf32> to vector<8x128xf32>
    %22 = vector.extract_strided_slice %20 {offsets = [0, 0], sizes = [8, 128], strides = [1, 1]} : vector<8x384xf32> to vector<8x128xf32>
    %23 = arith.addf %21, %22 : vector<8x128xf32>
    %24 = arith.negf %23 : vector<8x128xf32>
    %25 = math.exp %24 : vector<8x128xf32>
    %cst_18 = arith.constant 1.000000e+00 : f32
    %26 = vector.broadcast %cst_18 : f32 to vector<8x128xf32>
    %27 = arith.addf %26, %25 : vector<8x128xf32>
    %28 = arith.divf %26, %27 : vector<8x128xf32>
    %29 = vector.extract_strided_slice %18 {offsets = [0, 128], sizes = [8, 128], strides = [1, 1]} : vector<8x384xf32> to vector<8x128xf32>
    %30 = vector.extract_strided_slice %20 {offsets = [0, 128], sizes = [8, 128], strides = [1, 1]} : vector<8x384xf32> to vector<8x128xf32>
    %31 = arith.addf %29, %30 : vector<8x128xf32>
    %32 = arith.negf %31 : vector<8x128xf32>
    %33 = math.exp %32 : vector<8x128xf32>
    %cst_19 = arith.constant 1.000000e+00 : f32
    %34 = vector.broadcast %cst_19 : f32 to vector<8x128xf32>
    %35 = arith.addf %34, %33 : vector<8x128xf32>
    %36 = arith.divf %34, %35 : vector<8x128xf32>
    %37 = vector.extract_strided_slice %18 {offsets = [0, 256], sizes = [8, 128], strides = [1, 1]} : vector<8x384xf32> to vector<8x128xf32>
    %38 = vector.extract_strided_slice %20 {offsets = [0, 256], sizes = [8, 128], strides = [1, 1]} : vector<8x384xf32> to vector<8x128xf32>
    %39 = vector.broadcast %12 : vector<1x128xf32> to vector<8x128xf32>
    %40 = arith.addf %38, %39 : vector<8x128xf32>
    %41 = arith.mulf %28, %40 : vector<8x128xf32>
    %42 = arith.addf %37, %41 : vector<8x128xf32>
    %43 = math.tanh %42 : vector<8x128xf32>
    %cst_20 = arith.constant 1.000000e+00 : f32
    %44 = vector.broadcast %cst_20 : f32 to vector<8x128xf32>
    %45 = arith.subf %44, %36 : vector<8x128xf32>
    %46 = arith.mulf %45, %43 : vector<8x128xf32>
    %47 = arith.mulf %36, %14 : vector<8x128xf32>
    %48 = arith.addf %46, %47 : vector<8x128xf32>
    %49 = arith.addi %13, %c0_i32_15 : i32
    %c16_i32 = arith.constant 16 : i32
    %50 = arith.cmpi slt, %49, %c16_i32 : i32
    %51 = arith.select %50, %48, %14 : vector<8x128xf32>
    %c1_i32 = arith.constant 1 : i32
    %c8_i32_21 = arith.constant 8 : i32
    %52 = arith.muli %c1_i32, %c8_i32_21 : i32
    %53 = tpu.assume_multiple %52, 8 : i32
    %54 = arith.index_cast %53 : i32 to index
    %c0_22 = arith.constant 0 : index
    %55 = vector.load %arg8[%54, %c0_22] : memref<48x384xf32, #tpu.memory_space<vmem>>, vector<8x384xf32>
    %56 = arith.truncf %51 : vector<8x128xf32> to vector<8x128xbf16>
    %cst_23 = arith.constant dense<0.000000e+00> : vector<8x384xf32>
    %57 = tpu.matmul %56, %11, %cst_23 {dimension_numbers = #tpu.dot_dimension_numbers<[1], [0], [0], [1], [0, 0, 1, 1], [], []>} : vector<8x128xbf16>, vector<128x384xbf16>, vector<8x384xf32> -> vector<8x384xf32>
    %58 = vector.extract_strided_slice %55 {offsets = [0, 0], sizes = [8, 128], strides = [1, 1]} : vector<8x384xf32> to vector<8x128xf32>
    %59 = vector.extract_strided_slice %57 {offsets = [0, 0], sizes = [8, 128], strides = [1, 1]} : vector<8x384xf32> to vector<8x128xf32>
    %60 = arith.addf %58, %59 : vector<8x128xf32>
    %61 = arith.negf %60 : vector<8x128xf32>
    %62 = math.exp %61 : vector<8x128xf32>
    %cst_24 = arith.constant 1.000000e+00 : f32
    %63 = vector.broadcast %cst_24 : f32 to vector<8x128xf32>
    %64 = arith.addf %63, %62 : vector<8x128xf32>
    %65 = arith.divf %63, %64 : vector<8x128xf32>
    %66 = vector.extract_strided_slice %55 {offsets = [0, 128], sizes = [8, 128], strides = [1, 1]} : vector<8x384xf32> to vector<8x128xf32>
    %67 = vector.extract_strided_slice %57 {offsets = [0, 128], sizes = [8, 128], strides = [1, 1]} : vector<8x384xf32> to vector<8x128xf32>
    %68 = arith.addf %66, %67 : vector<8x128xf32>
    %69 = arith.negf %68 : vector<8x128xf32>
    %70 = math.exp %69 : vector<8x128xf32>
    %cst_25 = arith.constant 1.000000e+00 : f32
    %71 = vector.broadcast %cst_25 : f32 to vector<8x128xf32>
    %72 = arith.addf %71, %70 : vector<8x128xf32>
    %73 = arith.divf %71, %72 : vector<8x128xf32>
    %74 = vector.extract_strided_slice %55 {offsets = [0, 256], sizes = [8, 128], strides = [1, 1]} : vector<8x384xf32> to vector<8x128xf32>
    %75 = vector.extract_strided_slice %57 {offsets = [0, 256], sizes = [8, 128], strides = [1, 1]} : vector<8x384xf32> to vector<8x128xf32>
    %76 = vector.broadcast %12 : vector<1x128xf32> to vector<8x128xf32>
    %77 = arith.addf %75, %76 : vector<8x128xf32>
    %78 = arith.mulf %65, %77 : vector<8x128xf32>
    %79 = arith.addf %74, %78 : vector<8x128xf32>
    %80 = math.tanh %79 : vector<8x128xf32>
    %cst_26 = arith.constant 1.000000e+00 : f32
    %81 = vector.broadcast %cst_26 : f32 to vector<8x128xf32>
    %82 = arith.subf %81, %73 : vector<8x128xf32>
    %83 = arith.mulf %82, %80 : vector<8x128xf32>
    %84 = arith.mulf %73, %51 : vector<8x128xf32>
    %85 = arith.addf %83, %84 : vector<8x128xf32>
    %86 = arith.addi %13, %c1_i32 : i32
    %c16_i32_27 = arith.constant 16 : i32
    %87 = arith.cmpi slt, %86, %c16_i32_27 : i32
    %88 = arith.select %87, %85, %51 : vector<8x128xf32>
    %c2_i32 = arith.constant 2 : i32
    %c8_i32_28 = arith.constant 8 : i32
    %89 = arith.muli %c2_i32, %c8_i32_28 : i32
    %90 = tpu.assume_multiple %89, 8 : i32
    %91 = arith.index_cast %90 : i32 to index
    %c0_29 = arith.constant 0 : index
    %92 = vector.load %arg8[%91, %c0_29] : memref<48x384xf32, #tpu.memory_space<vmem>>, vector<8x384xf32>
    %93 = arith.truncf %88 : vector<8x128xf32> to vector<8x128xbf16>
    %cst_30 = arith.constant dense<0.000000e+00> : vector<8x384xf32>
    %94 = tpu.matmul %93, %11, %cst_30 {dimension_numbers = #tpu.dot_dimension_numbers<[1], [0], [0], [1], [0, 0, 1, 1], [], []>} : vector<8x128xbf16>, vector<128x384xbf16>, vector<8x384xf32> -> vector<8x384xf32>
    %95 = vector.extract_strided_slice %92 {offsets = [0, 0], sizes = [8, 128], strides = [1, 1]} : vector<8x384xf32> to vector<8x128xf32>
    %96 = vector.extract_strided_slice %94 {offsets = [0, 0], sizes = [8, 128], strides = [1, 1]} : vector<8x384xf32> to vector<8x128xf32>
    %97 = arith.addf %95, %96 : vector<8x128xf32>
    %98 = arith.negf %97 : vector<8x128xf32>
    %99 = math.exp %98 : vector<8x128xf32>
    %cst_31 = arith.constant 1.000000e+00 : f32
    %100 = vector.broadcast %cst_31 : f32 to vector<8x128xf32>
    %101 = arith.addf %100, %99 : vector<8x128xf32>
    %102 = arith.divf %100, %101 : vector<8x128xf32>
    %103 = vector.extract_strided_slice %92 {offsets = [0, 128], sizes = [8, 128], strides = [1, 1]} : vector<8x384xf32> to vector<8x128xf32>
    %104 = vector.extract_strided_slice %94 {offsets = [0, 128], sizes = [8, 128], strides = [1, 1]} : vector<8x384xf32> to vector<8x128xf32>
    %105 = arith.addf %103, %104 : vector<8x128xf32>
    %106 = arith.negf %105 : vector<8x128xf32>
    %107 = math.exp %106 : vector<8x128xf32>
    %cst_32 = arith.constant 1.000000e+00 : f32
    %108 = vector.broadcast %cst_32 : f32 to vector<8x128xf32>
    %109 = arith.addf %108, %107 : vector<8x128xf32>
    %110 = arith.divf %108, %109 : vector<8x128xf32>
    %111 = vector.extract_strided_slice %92 {offsets = [0, 256], sizes = [8, 128], strides = [1, 1]} : vector<8x384xf32> to vector<8x128xf32>
    %112 = vector.extract_strided_slice %94 {offsets = [0, 256], sizes = [8, 128], strides = [1, 1]} : vector<8x384xf32> to vector<8x128xf32>
    %113 = vector.broadcast %12 : vector<1x128xf32> to vector<8x128xf32>
    %114 = arith.addf %112, %113 : vector<8x128xf32>
    %115 = arith.mulf %102, %114 : vector<8x128xf32>
    %116 = arith.addf %111, %115 : vector<8x128xf32>
    %117 = math.tanh %116 : vector<8x128xf32>
    %cst_33 = arith.constant 1.000000e+00 : f32
    %118 = vector.broadcast %cst_33 : f32 to vector<8x128xf32>
    %119 = arith.subf %118, %110 : vector<8x128xf32>
    %120 = arith.mulf %119, %117 : vector<8x128xf32>
    %121 = arith.mulf %110, %88 : vector<8x128xf32>
    %122 = arith.addf %120, %121 : vector<8x128xf32>
    %123 = arith.addi %13, %c2_i32 : i32
    %c16_i32_34 = arith.constant 16 : i32
    %124 = arith.cmpi slt, %123, %c16_i32_34 : i32
    %125 = arith.select %124, %122, %88 : vector<8x128xf32>
    %c3_i32 = arith.constant 3 : i32
    %c8_i32_35 = arith.constant 8 : i32
    %126 = arith.muli %c3_i32, %c8_i32_35 : i32
    %127 = tpu.assume_multiple %126, 8 : i32
    %128 = arith.index_cast %127 : i32 to index
    %c0_36 = arith.constant 0 : index
    %129 = vector.load %arg8[%128, %c0_36] : memref<48x384xf32, #tpu.memory_space<vmem>>, vector<8x384xf32>
    %130 = arith.truncf %125 : vector<8x128xf32> to vector<8x128xbf16>
    %cst_37 = arith.constant dense<0.000000e+00> : vector<8x384xf32>
    %131 = tpu.matmul %130, %11, %cst_37 {dimension_numbers = #tpu.dot_dimension_numbers<[1], [0], [0], [1], [0, 0, 1, 1], [], []>} : vector<8x128xbf16>, vector<128x384xbf16>, vector<8x384xf32> -> vector<8x384xf32>
    %132 = vector.extract_strided_slice %129 {offsets = [0, 0], sizes = [8, 128], strides = [1, 1]} : vector<8x384xf32> to vector<8x128xf32>
    %133 = vector.extract_strided_slice %131 {offsets = [0, 0], sizes = [8, 128], strides = [1, 1]} : vector<8x384xf32> to vector<8x128xf32>
    %134 = arith.addf %132, %133 : vector<8x128xf32>
    %135 = arith.negf %134 : vector<8x128xf32>
    %136 = math.exp %135 : vector<8x128xf32>
    %cst_38 = arith.constant 1.000000e+00 : f32
    %137 = vector.broadcast %cst_38 : f32 to vector<8x128xf32>
    %138 = arith.addf %137, %136 : vector<8x128xf32>
    %139 = arith.divf %137, %138 : vector<8x128xf32>
    %140 = vector.extract_strided_slice %129 {offsets = [0, 128], sizes = [8, 128], strides = [1, 1]} : vector<8x384xf32> to vector<8x128xf32>
    %141 = vector.extract_strided_slice %131 {offsets = [0, 128], sizes = [8, 128], strides = [1, 1]} : vector<8x384xf32> to vector<8x128xf32>
    %142 = arith.addf %140, %141 : vector<8x128xf32>
    %143 = arith.negf %142 : vector<8x128xf32>
    %144 = math.exp %143 : vector<8x128xf32>
    %cst_39 = arith.constant 1.000000e+00 : f32
    %145 = vector.broadcast %cst_39 : f32 to vector<8x128xf32>
    %146 = arith.addf %145, %144 : vector<8x128xf32>
    %147 = arith.divf %145, %146 : vector<8x128xf32>
    %148 = vector.extract_strided_slice %129 {offsets = [0, 256], sizes = [8, 128], strides = [1, 1]} : vector<8x384xf32> to vector<8x128xf32>
    %149 = vector.extract_strided_slice %131 {offsets = [0, 256], sizes = [8, 128], strides = [1, 1]} : vector<8x384xf32> to vector<8x128xf32>
    %150 = vector.broadcast %12 : vector<1x128xf32> to vector<8x128xf32>
    %151 = arith.addf %149, %150 : vector<8x128xf32>
    %152 = arith.mulf %139, %151 : vector<8x128xf32>
    %153 = arith.addf %148, %152 : vector<8x128xf32>
    %154 = math.tanh %153 : vector<8x128xf32>
    %cst_40 = arith.constant 1.000000e+00 : f32
    %155 = vector.broadcast %cst_40 : f32 to vector<8x128xf32>
    %156 = arith.subf %155, %147 : vector<8x128xf32>
    %157 = arith.mulf %156, %154 : vector<8x128xf32>
    %158 = arith.mulf %147, %125 : vector<8x128xf32>
    %159 = arith.addf %157, %158 : vector<8x128xf32>
    %160 = arith.addi %13, %c3_i32 : i32
    %c16_i32_41 = arith.constant 16 : i32
    %161 = arith.cmpi slt, %160, %c16_i32_41 : i32
    %162 = arith.select %161, %159, %125 : vector<8x128xf32>
    %c4_i32 = arith.constant 4 : i32
    %c8_i32_42 = arith.constant 8 : i32
    %163 = arith.muli %c4_i32, %c8_i32_42 : i32
    %164 = tpu.assume_multiple %163, 8 : i32
    %165 = arith.index_cast %164 : i32 to index
    %c0_43 = arith.constant 0 : index
    %166 = vector.load %arg8[%165, %c0_43] : memref<48x384xf32, #tpu.memory_space<vmem>>, vector<8x384xf32>
    %167 = arith.truncf %162 : vector<8x128xf32> to vector<8x128xbf16>
    %cst_44 = arith.constant dense<0.000000e+00> : vector<8x384xf32>
    %168 = tpu.matmul %167, %11, %cst_44 {dimension_numbers = #tpu.dot_dimension_numbers<[1], [0], [0], [1], [0, 0, 1, 1], [], []>} : vector<8x128xbf16>, vector<128x384xbf16>, vector<8x384xf32> -> vector<8x384xf32>
    %169 = vector.extract_strided_slice %166 {offsets = [0, 0], sizes = [8, 128], strides = [1, 1]} : vector<8x384xf32> to vector<8x128xf32>
    %170 = vector.extract_strided_slice %168 {offsets = [0, 0], sizes = [8, 128], strides = [1, 1]} : vector<8x384xf32> to vector<8x128xf32>
    %171 = arith.addf %169, %170 : vector<8x128xf32>
    %172 = arith.negf %171 : vector<8x128xf32>
    %173 = math.exp %172 : vector<8x128xf32>
    %cst_45 = arith.constant 1.000000e+00 : f32
    %174 = vector.broadcast %cst_45 : f32 to vector<8x128xf32>
    %175 = arith.addf %174, %173 : vector<8x128xf32>
    %176 = arith.divf %174, %175 : vector<8x128xf32>
    %177 = vector.extract_strided_slice %166 {offsets = [0, 128], sizes = [8, 128], strides = [1, 1]} : vector<8x384xf32> to vector<8x128xf32>
    %178 = vector.extract_strided_slice %168 {offsets = [0, 128], sizes = [8, 128], strides = [1, 1]} : vector<8x384xf32> to vector<8x128xf32>
    %179 = arith.addf %177, %178 : vector<8x128xf32>
    %180 = arith.negf %179 : vector<8x128xf32>
    %181 = math.exp %180 : vector<8x128xf32>
    %cst_46 = arith.constant 1.000000e+00 : f32
    %182 = vector.broadcast %cst_46 : f32 to vector<8x128xf32>
    %183 = arith.addf %182, %181 : vector<8x128xf32>
    %184 = arith.divf %182, %183 : vector<8x128xf32>
    %185 = vector.extract_strided_slice %166 {offsets = [0, 256], sizes = [8, 128], strides = [1, 1]} : vector<8x384xf32> to vector<8x128xf32>
    %186 = vector.extract_strided_slice %168 {offsets = [0, 256], sizes = [8, 128], strides = [1, 1]} : vector<8x384xf32> to vector<8x128xf32>
    %187 = vector.broadcast %12 : vector<1x128xf32> to vector<8x128xf32>
    %188 = arith.addf %186, %187 : vector<8x128xf32>
    %189 = arith.mulf %176, %188 : vector<8x128xf32>
    %190 = arith.addf %185, %189 : vector<8x128xf32>
    %191 = math.tanh %190 : vector<8x128xf32>
    %cst_47 = arith.constant 1.000000e+00 : f32
    %192 = vector.broadcast %cst_47 : f32 to vector<8x128xf32>
    %193 = arith.subf %192, %184 : vector<8x128xf32>
    %194 = arith.mulf %193, %191 : vector<8x128xf32>
    %195 = arith.mulf %184, %162 : vector<8x128xf32>
    %196 = arith.addf %194, %195 : vector<8x128xf32>
    %197 = arith.addi %13, %c4_i32 : i32
    %c16_i32_48 = arith.constant 16 : i32
    %198 = arith.cmpi slt, %197, %c16_i32_48 : i32
    %199 = arith.select %198, %196, %162 : vector<8x128xf32>
    %c5_i32 = arith.constant 5 : i32
    %c8_i32_49 = arith.constant 8 : i32
    %200 = arith.muli %c5_i32, %c8_i32_49 : i32
    %201 = tpu.assume_multiple %200, 8 : i32
    %202 = arith.index_cast %201 : i32 to index
    %c0_50 = arith.constant 0 : index
    %203 = vector.load %arg8[%202, %c0_50] : memref<48x384xf32, #tpu.memory_space<vmem>>, vector<8x384xf32>
    %204 = arith.truncf %199 : vector<8x128xf32> to vector<8x128xbf16>
    %cst_51 = arith.constant dense<0.000000e+00> : vector<8x384xf32>
    %205 = tpu.matmul %204, %11, %cst_51 {dimension_numbers = #tpu.dot_dimension_numbers<[1], [0], [0], [1], [0, 0, 1, 1], [], []>} : vector<8x128xbf16>, vector<128x384xbf16>, vector<8x384xf32> -> vector<8x384xf32>
    %206 = vector.extract_strided_slice %203 {offsets = [0, 0], sizes = [8, 128], strides = [1, 1]} : vector<8x384xf32> to vector<8x128xf32>
    %207 = vector.extract_strided_slice %205 {offsets = [0, 0], sizes = [8, 128], strides = [1, 1]} : vector<8x384xf32> to vector<8x128xf32>
    %208 = arith.addf %206, %207 : vector<8x128xf32>
    %209 = arith.negf %208 : vector<8x128xf32>
    %210 = math.exp %209 : vector<8x128xf32>
    %cst_52 = arith.constant 1.000000e+00 : f32
    %211 = vector.broadcast %cst_52 : f32 to vector<8x128xf32>
    %212 = arith.addf %211, %210 : vector<8x128xf32>
    %213 = arith.divf %211, %212 : vector<8x128xf32>
    %214 = vector.extract_strided_slice %203 {offsets = [0, 128], sizes = [8, 128], strides = [1, 1]} : vector<8x384xf32> to vector<8x128xf32>
    %215 = vector.extract_strided_slice %205 {offsets = [0, 128], sizes = [8, 128], strides = [1, 1]} : vector<8x384xf32> to vector<8x128xf32>
    %216 = arith.addf %214, %215 : vector<8x128xf32>
    %217 = arith.negf %216 : vector<8x128xf32>
    %218 = math.exp %217 : vector<8x128xf32>
    %cst_53 = arith.constant 1.000000e+00 : f32
    %219 = vector.broadcast %cst_53 : f32 to vector<8x128xf32>
    %220 = arith.addf %219, %218 : vector<8x128xf32>
    %221 = arith.divf %219, %220 : vector<8x128xf32>
    %222 = vector.extract_strided_slice %203 {offsets = [0, 256], sizes = [8, 128], strides = [1, 1]} : vector<8x384xf32> to vector<8x128xf32>
    %223 = vector.extract_strided_slice %205 {offsets = [0, 256], sizes = [8, 128], strides = [1, 1]} : vector<8x384xf32> to vector<8x128xf32>
    %224 = vector.broadcast %12 : vector<1x128xf32> to vector<8x128xf32>
    %225 = arith.addf %223, %224 : vector<8x128xf32>
    %226 = arith.mulf %213, %225 : vector<8x128xf32>
    %227 = arith.addf %222, %226 : vector<8x128xf32>
    %228 = math.tanh %227 : vector<8x128xf32>
    %cst_54 = arith.constant 1.000000e+00 : f32
    %229 = vector.broadcast %cst_54 : f32 to vector<8x128xf32>
    %230 = arith.subf %229, %221 : vector<8x128xf32>
    %231 = arith.mulf %230, %228 : vector<8x128xf32>
    %232 = arith.mulf %221, %199 : vector<8x128xf32>
    %233 = arith.addf %231, %232 : vector<8x128xf32>
    %234 = arith.addi %13, %c5_i32 : i32
    %c16_i32_55 = arith.constant 16 : i32
    %235 = arith.cmpi slt, %234, %c16_i32_55 : i32
    %236 = arith.select %235, %233, %199 : vector<8x128xf32>
    %c6_i32_56 = arith.constant 6 : i32
    %c0_57 = arith.constant 0 : index
    %c0_58 = arith.constant 0 : index
    %237 = vector.load %arg7[%c0_57, %c0_58] : memref<8x128xf32, #tpu.memory_space<vmem>>, vector<8x128xf32>
    tpu.vector_store %arg7[%c0_57, %c0_58], %236 {strides = array<i32>} : memref<8x128xf32, #tpu.memory_space<vmem>>, vector<8x128xf32>,
    return
  }
  func.func @transform_0(%arg0: i32, %arg1: i32) -> (i32, i32, i32) {
    %c0_i32 = arith.constant 0 : i32
    %c0_i32_0 = arith.constant 0 : i32
    return %arg1, %arg0, %c0_i32 : i32, i32, i32
  }
  func.func @transform_1(%arg0: i32, %arg1: i32) -> (i32, i32) {
    %c0_i32 = arith.constant 0 : i32
    %c0_i32_0 = arith.constant 0 : i32
    %c0_i32_1 = arith.constant 0 : i32
    return %c0_i32, %c0_i32_0 : i32, i32
  }
  func.func @transform_2(%arg0: i32, %arg1: i32) -> (i32, i32) {
    %c0_i32 = arith.constant 0 : i32
    %c0_i32_0 = arith.constant 0 : i32
    %c0_i32_1 = arith.constant 0 : i32
    return %c0_i32, %c0_i32_0 : i32, i32
  }
  func.func @transform_3(%arg0: i32, %arg1: i32) -> (i32, i32) {
    %c0_i32 = arith.constant 0 : i32
    %c0_i32_0 = arith.constant 0 : i32
    %c0_i32_1 = arith.constant 0 : i32
    return %c0_i32, %c0_i32_0 : i32, i32
  }
  func.func @transform_4(%arg0: i32, %arg1: i32) -> (i32, i32) {
    %c0_i32 = arith.constant 0 : i32
    %c0_i32_0 = arith.constant 0 : i32
    %c0_i32_1 = arith.constant 0 : i32
    return %c0_i32, %c0_i32_0 : i32, i32
  }
  func.func @transform_5(%arg0: i32, %arg1: i32) -> (i32, i32) {
    %c0_i32 = arith.constant 0 : i32
    %c0_i32_0 = arith.constant 0 : i32
    return %arg0, %c0_i32 : i32, i32
  }
}

</mosaic_0001>

<llo_original>
// kernel: tpu_custom_call.1
$region0: #{tpu_custom_call.1}
  #allocation0 [shape = 'u32[]', space=smem, size = 0x4, offset = 0x4, fixed_abs, tag = 'smem constant byte address 0x4 - core index']
  #allocation1 [shape = 'u32[144,128]{1,0:T(1,128)}', space=vmem, size = 0x12000, scoped, tag = 'internal scratch']
  #allocation2 [shape = 'f32[48,384]{1,0:T(8,128)}', space=vmem, size = 0x12000, scoped, tag = 'scratch operand']
  %s0 = inlined_call_operand.vmem [shape: bf16[18,8,4], index: 0, kind: input, shape index: {}]
  %s1 = inlined_call_operand.vmem [shape: bf16[4,384], index: 1, kind: input, shape index: {}]
  %s2 = inlined_call_operand.vmem [shape: f32[1,384], index: 2, kind: input, shape index: {}]
  %s3 = inlined_call_operand.hbm [shape: bf16[128,384], index: 3, kind: input, shape index: {}]
  %s4 = inlined_call_operand.vmem [shape: f32[1,128], index: 4, kind: input, shape index: {}]
  %s5 = inlined_call_operand.hbm [shape: f32[8,128], index: 5, kind: output, shape index: {}]
  %s6 = sld [smem:[#allocation0]]
  $region61: #{tpu_custom_call.1} parent=0
    _
  %s8 = ssub.s32 1, %s6
  %s9 = scalar_select 0, %s8, %s6
  $region1: #{tpu_custom_call.1} parent=0
    #allocation3 [shape = 'u8[98304]{0}', space=vmem, size = 0x18000, scoped, tag = 'input window, operand 3, single buffered']
    #allocation4 [shape = 's32[2]{0}', space=sflag, size = 0x8, scoped, tag = 'scoped memory for tpu_custom_call.1']
    #allocation5 [shape = 's32[2]{0}', space=sflag, size = 0x8, scoped, tag = 'scoped memory for tpu_custom_call.1']
    #allocation6 [shape = 'u8[4096]{0}', space=vmem, size = 0x1000, scoped, tag = 'output window, operand 0, single buffered']
    %10 = vsyncpa [#allocation4], 0
    %11 = vsyncpa [#allocation5], 0
    loop: start=0, step=1, limit=5
    $region2: #{tpu_custom_call.1} parent=1 // loop_pre_header
      _
    $region3: #{tpu_custom_call.1} parent=1 // loop_header
      %s13 = sphi 0, %s17
      %p14 = scmp.ge.s32.totalorder %s13, 5
      %s20 = sphi 0, %s32
      %s21 = sphi 0, %s28
      %s22 = sphi 0, %s20
      %s23 = sphi 0, %s21
      %s24 = sphi 0, %s22
      %s25 = sphi 0, %s23
      %s37 = sphi 0, %s39
      %s40 = sphi 0, %s37
      %s41 = sphi 0, %s40
      %s57 = sphi 0, %s41
      %s61 = sphi 0, %s61
      %s63 = sphi 0, %s61
      %s64 = sphi 0, %s63
      %s78 = sphi 0, %s64
      %s82 = sphi 0, %s82
      %s84 = sphi 0, %s82
      %s85 = sphi 0, %s84
      %s99 = sphi 0, %s85
      %s103 = sphi 0, %s103
      %s105 = sphi 0, %s103
      %s106 = sphi 0, %s105
      %s120 = sphi 0, %s106
      %s124 = sphi 0, %s124
      %s126 = sphi 0, %s124
      %s127 = sphi 0, %s126
      %s141 = sphi 0, %s127
      %s147 = sphi 0, %s149
      %s150 = sphi 0, %s147
      %s151 = sphi 0, %s150
      %s167 = sphi 0, %s151
    $region4: #{tpu_custom_call.1} parent=1 // loop_header_branch
      %16 = sbr.rel (%p14) target = $region8
    $region5: #{tpu_custom_call.1} parent=1 // loop_body
      %s18 = ssub.s32 %s13, 1
      %s19 = ssub.s32 %s13, 2
      %s26 = sadd.s32 1, %s21
      %p27 = scmp.ge.s32.totalorder %s26, 3
      %s28 = scalar_select %p27, 0, %s26
      %s29 = sadd.s32 1, %s20
      %s30 = scalar_select %p27, %s29, %s20
      %p31 = scmp.ge.s32.totalorder %s30, 1
      %s32 = scalar_select %p31, 0, %s30
      %s33 = ssub.s32 %s21, %s28
      %s34 = ssub.s32 %s20, %s32
      %s35 = sor.u32 %s33, %s34
      %p36 = scmp.eq.s32.totalorder %s35, 0
      %s38 = sadd.s32 %s37, 1
      %s39 = scalar_select %p36, %s37, %s38
      %p42 = pneg %p36
      %p43 = scmp.eq.s32.totalorder %s13, 2
      %p44 = por %p42, %p43
      %p45 = scmp.ne.s32.totalorder %s37, %s40
      %p46 = scmp.eq.s32.totalorder %s13, 0
      %p47 = por %p45, %p46
      %p48 = scmp.ne.s32.totalorder %s37, %s40
      %p49 = scmp.eq.s32.totalorder %s18, 2
      %p50 = por %p48, %p49
      %p51 = scmp.ne.s32.totalorder %s40, %s41
      %p52 = scmp.eq.s32.totalorder %s18, 0
      %p53 = por %p51, %p52
      %p54 = scmp.ne.s32.totalorder %s40, %s41
      %p55 = scmp.eq.s32.totalorder %s19, 2
      %p56 = por %p54, %p55
      %p58 = scmp.ne.s32.totalorder %s41, %s57
      %p59 = scmp.eq.s32.totalorder %s19, 0
      %p60 = por %p58, %p59
      %s62 = sadd.s32 %s61, 1
      %p65 = scmp.eq.s32.totalorder %s13, 2
      %p66 = scmp.ne.s32.totalorder %s61, %s63
      %p67 = scmp.eq.s32.totalorder %s13, 0
      %p68 = por %p66, %p67
      %p69 = scmp.ne.s32.totalorder %s61, %s63
      %p70 = scmp.eq.s32.totalorder %s18, 2
      %p71 = por %p69, %p70
      %p72 = scmp.ne.s32.totalorder %s63, %s64
      %p73 = scmp.eq.s32.totalorder %s18, 0
      %p74 = por %p72, %p73
      %p75 = scmp.ne.s32.totalorder %s63, %s64
      %p76 = scmp.eq.s32.totalorder %s19, 2
      %p77 = por %p75, %p76
      %p79 = scmp.ne.s32.totalorder %s64, %s78
      %p80 = scmp.eq.s32.totalorder %s19, 0
      %p81 = por %p79, %p80
      %s83 = sadd.s32 %s82, 1
      %p86 = scmp.eq.s32.totalorder %s13, 2
      %p87 = scmp.ne.s32.totalorder %s82, %s84
      %p88 = scmp.eq.s32.totalorder %s13, 0
      %p89 = por %p87, %p88
      %p90 = scmp.ne.s32.totalorder %s82, %s84
      %p91 = scmp.eq.s32.totalorder %s18, 2
      %p92 = por %p90, %p91
      %p93 = scmp.ne.s32.totalorder %s84, %s85
      %p94 = scmp.eq.s32.totalorder %s18, 0
      %p95 = por %p93, %p94
      %p96 = scmp.ne.s32.totalorder %s84, %s85
      %p97 = scmp.eq.s32.totalorder %s19, 2
      %p98 = por %p96, %p97
      %p100 = scmp.ne.s32.totalorder %s85, %s99
      %p101 = scmp.eq.s32.totalorder %s19, 0
      %p102 = por %p100, %p101
      %s104 = sadd.s32 %s103, 1
      %p107 = scmp.eq.s32.totalorder %s13, 2
      %p108 = scmp.ne.s32.totalorder %s103, %s105
      %p109 = scmp.eq.s32.totalorder %s13, 0
      %p110 = por %p108, %p109
      %p111 = scmp.ne.s32.totalorder %s103, %s105
      %p112 = scmp.eq.s32.totalorder %s18, 2
      %p113 = por %p111, %p112
      %p114 = scmp.ne.s32.totalorder %s105, %s106
      %p115 = scmp.eq.s32.totalorder %s18, 0
      %p116 = por %p114, %p115
      %p117 = scmp.ne.s32.totalorder %s105, %s106
      %p118 = scmp.eq.s32.totalorder %s19, 2
      %p119 = por %p117, %p118
      %p121 = scmp.ne.s32.totalorder %s106, %s120
      %p122 = scmp.eq.s32.totalorder %s19, 0
      %p123 = por %p121, %p122
      %s125 = sadd.s32 %s124, 1
      %p128 = scmp.eq.s32.totalorder %s13, 2
      %p129 = scmp.ne.s32.totalorder %s124, %s126
      %p130 = scmp.eq.s32.totalorder %s13, 0
      %p131 = por %p129, %p130
      %p132 = scmp.ne.s32.totalorder %s124, %s126
      %p133 = scmp.eq.s32.totalorder %s18, 2
      %p134 = por %p132, %p133
      %p135 = scmp.ne.s32.totalorder %s126, %s127
      %p136 = scmp.eq.s32.totalorder %s18, 0
      %p137 = por %p135, %p136
      %p138 = scmp.ne.s32.totalorder %s126, %s127
      %p139 = scmp.eq.s32.totalorder %s19, 2
      %p140 = por %p138, %p139
      %p142 = scmp.ne.s32.totalorder %s127, %s141
      %p143 = scmp.eq.s32.totalorder %s19, 0
      %p144 = por %p142, %p143
      %s145 = ssub.s32 %s20, %s32
      %p146 = scmp.eq.s32.totalorder %s145, 0
      %s148 = sadd.s32 %s147, 1
      %s149 = scalar_select %p146, %s147, %s148
      %p152 = pneg %p146
      %p153 = scmp.eq.s32.totalorder %s13, 2
      %p154 = por %p152, %p153
      %p155 = scmp.ne.s32.totalorder %s147, %s150
      %p156 = scmp.eq.s32.totalorder %s13, 0
      %p157 = por %p155, %p156
      %p158 = scmp.ne.s32.totalorder %s147, %s150
      %p159 = scmp.eq.s32.totalorder %s18, 2
      %p160 = por %p158, %p159
      %p161 = scmp.ne.s32.totalorder %s150, %s151
      %p162 = scmp.eq.s32.totalorder %s18, 0
      %p163 = por %p161, %p162
      %p164 = scmp.ne.s32.totalorder %s150, %s151
      %p165 = scmp.eq.s32.totalorder %s19, 2
      %p166 = por %p164, %p165
      %p168 = scmp.ne.s32.totalorder %s151, %s167
      %p169 = scmp.eq.s32.totalorder %s19, 0
      %p170 = por %p168, %p169
      %p171 = scmp.le.s32.totalorder 1, %s13
      %p172 = scmp.lt.s32.totalorder %s13, 4
      %p173 = pnand %p171, %p172
      %p174 = pneg %p173
      // Predicated region
      $region9: #{tpu_custom_call.1} parent=5 // pred_check
        _
      $region10: #{tpu_custom_call.1} parent=5 // pred_check_branch
        %176 = sbr.rel (%p173) target = $region12
      $region11: #{tpu_custom_call.1} parent=5 // pred_region
        %s177 = ssub.s32 %s13, 1
        // Predicated region
        $region13: #{tpu_custom_call.1} parent=11 // pred_check
          %p178 = pneg %p74
        $region14: #{tpu_custom_call.1} parent=11 // pred_check_branch
          %180 = sbr.rel (%p178) target = $region16
        $region15: #{tpu_custom_call.1} parent=11 // pred_region
          _
        $region16: #{tpu_custom_call.1} parent=11 // pred_fallthru
          _
        // Predicated region
        $region17: #{tpu_custom_call.1} parent=11 // pred_check
          %p181 = pneg %p95
        $region18: #{tpu_custom_call.1} parent=11 // pred_check_branch
          %183 = sbr.rel (%p181) target = $region20
        $region19: #{tpu_custom_call.1} parent=11 // pred_region
          _
        $region20: #{tpu_custom_call.1} parent=11 // pred_fallthru
          _
        // Predicated region
        $region21: #{tpu_custom_call.1} parent=11 // pred_check
          %p184 = pneg %p116
        $region22: #{tpu_custom_call.1} parent=11 // pred_check_branch
          %186 = sbr.rel (%p184) target = $region24
        $region23: #{tpu_custom_call.1} parent=11 // pred_region
          %s188 = ssub.s32 3072, 3072
          %189 = vsyncadd [#allocation4], %s188
          %s190 = sshll.u32 [#allocation3], 4
          %s191 = int_to_ptr.vmem [resolvable:$true] %s190
          %196 = dma.hbm_to_vmem [thread:$0]  %s3, 3072, %s191, [#allocation4], 192, 192, 12
        $region24: #{tpu_custom_call.1} parent=11 // pred_fallthru
          _
        // Predicated region
        $region25: #{tpu_custom_call.1} parent=11 // pred_check
          %p197 = pneg %p137
        $region26: #{tpu_custom_call.1} parent=11 // pred_check_branch
          %199 = sbr.rel (%p197) target = $region28
        $region27: #{tpu_custom_call.1} parent=11 // pred_region
          _
        $region28: #{tpu_custom_call.1} parent=11 // pred_fallthru
          _
      $region12: #{tpu_custom_call.1} parent=5 // pred_fallthru
        _
      %p200 = scmp.lt.s32.totalorder %s13, 3
      // Predicated region
      $region29: #{tpu_custom_call.1} parent=5 // pred_check
        %p201 = pneg %p200
      $region30: #{tpu_custom_call.1} parent=5 // pred_check_branch
        %203 = sbr.rel (%p201) target = $region32
      $region31: #{tpu_custom_call.1} parent=5 // pred_region
        // Predicated region
        $region33: #{tpu_custom_call.1} parent=31 // pred_check
          %p204 = pneg %p47
        $region34: #{tpu_custom_call.1} parent=31 // pred_check_branch
          %206 = sbr.rel (%p204) target = $region36
        $region35: #{tpu_custom_call.1} parent=31 // pred_region
          %s207 = smul.u32 6, %s21
          %p208 = scmp.lt.s32.totalorder %s207, 17
          %s209 = scalar_select %p208, %s207, 17
          %p210 = scmp.lt.s32.totalorder %s20, 0
          %s211 = scalar_select %p210, %s20, 0
          %s212 = sadd.s32 %s211, %s209
          %s213 = smul.addr %s212, 4
          %s214 = scalar_lea.vmem %s0, %s213
          %s215 = smul.u32 6, %s21
        $region36: #{tpu_custom_call.1} parent=31 // pred_fallthru
          _
      $region32: #{tpu_custom_call.1} parent=5 // pred_fallthru
        _
      %p216 = scmp.le.s32.totalorder 1, %s13
      %p217 = scmp.lt.s32.totalorder %s13, 4
      %p218 = pnand %p216, %p217
      %p219 = pneg %p218
      // Predicated region
      $region37: #{tpu_custom_call.1} parent=5 // pred_check
        _
      $region38: #{tpu_custom_call.1} parent=5 // pred_check_branch
        %221 = sbr.rel (%p218) target = $region40
      $region39: #{tpu_custom_call.1} parent=5 // pred_region
        %s222 = ssub.s32 %s13, 1
        // Predicated region
        $region41: #{tpu_custom_call.1} parent=39 // pred_check
          %p223 = pneg %p116
        $region42: #{tpu_custom_call.1} parent=39 // pred_check_branch
          %225 = sbr.rel (%p223) target = $region44
        $region43: #{tpu_custom_call.1} parent=39 // pred_region
          %226 = dma.done [#allocation4], 3072
        $region44: #{tpu_custom_call.1} parent=39 // pred_fallthru
          _
        %s227 = smul.u32 6, %s23
        %p228 = scmp.lt.s32.totalorder %s227, 17
        %s229 = scalar_select %p228, %s227, 17
        %p230 = scmp.lt.s32.totalorder %s22, 0
        %s231 = scalar_select %p230, %s22, 0
        %s232 = sadd.s32 %s231, %s229
        %s233 = smul.addr %s232, 4
        %s234 = scalar_lea.vmem %s0, %s233
        %p235 = pneg %p53
        %p236 = pneg %p50
        %p237 = pneg %p74
        %p238 = pneg %p71
        %p239 = pneg %p95
        %p240 = pneg %p92
        %p241 = pneg %p116
        %p242 = pneg %p113
        %p243 = pneg %p137
        %p244 = pneg %p134
        %p245 = pneg %p163
        %p246 = pneg %p160
        %s247 = smul.u32 6, %s23
        %p248 = scmp.lt.s32.totalorder %s247, 17
        %s249 = scalar_select %p248, %s247, 17
        %p250 = scmp.lt.s32.totalorder %s22, 0
        %s251 = scalar_select %p250, %s22, 0
        %s252 = sadd.s32 %s251, %s249
        %s253 = smul.addr %s252, 4
        %s254 = scalar_lea.vmem %s0, %s253
        %s255 = smul.u32 6, %s23
        %p257 = scmp.eq.s32.totalorder %s23, 0
        // Predicated region
        $region45: #{tpu_custom_call.1} parent=39 // pred_check
          %p258 = pneg %p257
        $region46: #{tpu_custom_call.1} parent=39 // pred_check_branch
          %260 = sbr.rel (%p258) target = $region48
        $region47: #{tpu_custom_call.1} parent=39 // pred_region
          %261 = vst [vmem:[#allocation6] sm:$0xff] 0.0
        $region48: #{tpu_custom_call.1} parent=39 // pred_fallthru
          _
        %v262 = vld [vmem:[%s254] sm:$0xf]
        %v263 = vld [vmem:[%s254 + $0x4] sm:$0xf]
        %v264 = vld [vmem:[%s254 + $0x8] sm:$0xf]
        %v265 = vld [vmem:[%s254 + $0xc] sm:$0xf]
        %v266 = vld [vmem:[%s254 + $0x10] sm:$0xf]
        %v267 = vld [vmem:[%s254 + $0x14] sm:$0xf]
        %v268 = vld [vmem:[%s1] sm:$0x3f]
        %v269 = vld [vmem:[%s2] sm:$0x7]
        %v271 = vlaneseq
        %v272 = vshrl.u32 %v271, 7
        %v273 = vsub.s32 0, %v272
        %v274 = vrot.slane %v269, %v273
        %v275 = vlaneseq
        %v276 = vshrl.u32 %v275, 7
        %v277 = vsub.s32 1, %v276
        %v278 = vrot.slane %v269, %v277
        %v279 = vlaneseq
        %v280 = vshrl.u32 %v279, 7
        %v281 = vsub.s32 2, %v280
        %v282 = vrot.slane %v269, %v281
        %v292 = vunpack.c.l.b16 %v262
        %v293 = vunpack.c.l.b16 %v263
        %v294 = vunpack.c.l.b16 %v264
        %v295 = vunpack.c.l.b16 %v265
        %v296 = vunpack.c.l.b16 %v266
        %v297 = vunpack.c.l.b16 %v267
        %v298 = vpack.c.b16 %v293, %v292
        %v299 = vpack.c.b16 %v295, %v294
        %v300 = vpack.c.b16 %v297, %v296
        %v302 = vcombine.high %v268, %v268
        %v304 = vunpack.c.l.s4 1983009808
        %v305 = vunpack.c.0.s8 %v304
        %v306 = vlaneseq
        %v307 = vshrl.u32 %v306, 7
        %v308 = vsub.s32 %v305, %v307
        %v309 = vrot.slane %v268, %v308
        %v311 = vunpack.c.l.s4 1983009808
        %v312 = vunpack.c.0.s8 %v311
        %v313 = vlaneseq
        %v314 = vshrl.u32 %v313, 7
        %v315 = vsub.s32 %v312, %v314
        %v316 = vrot.slane %v302, %v315
        %v317 = vcombine.high %v309, %v309
        %vm318 = vcmask 31744
        %v320 = vsel %vm318, %v298, 0
        %v323 = vsel %vm318, %v299, 0
        %v326 = vsel %vm318, %v300, 0
        %vm328 = vcmask 1041408
        %v330 = vsel %vm328, %v309, 0
        %v333 = vsel %vm328, %v317, 0
        %v336 = vsel %vm328, %v316, 0
        %338 = vmatprep.subr.bf16.mxu0 %v333
        %339 = vmatpush1.bf16.msra.mxu0 %v330
        %340 = vmatprep.subr.bf16.mxu0 0
        %341 = vmatpush1.bf16.msra.mxu0 0
        %342 = vmatprep.subr.bf16.mxu0 0
        %343 = vmatpush1.bf16.msra.mxu0 0
        %344 = vmatprep.subr.bf16.mxu0 0
        %345 = vmatpush1.bf16.msra.mxu0 0
        %346 = vmatprep.subr.bf16.mxu0 0
        %347 = vmatpush1.bf16.msra.mxu0 0
        %348 = vmatprep.subr.bf16.mxu0 0
        %349 = vmatpush1.bf16.msra.mxu0 0
        %350 = vmatprep.subr.bf16.mxu0 0
        %351 = vmatpush1.bf16.msra.mxu0 0
        %352 = vmatprep.subr.bf16.mxu0 0
        %353 = vmatpush1.bf16.msra.mxu0 0
        %354 = vmatprep.subr.bf16.mxu0 0
        %355 = vmatpush1.bf16.msra.mxu0 0
        %356 = vmatprep.subr.bf16.mxu0 0
        %357 = vmatpush1.bf16.msra.mxu0 0
        %358 = vmatprep.subr.bf16.mxu0 0
        %359 = vmatpush1.bf16.msra.mxu0 0
        %360 = vmatprep.subr.bf16.mxu0 0
        %361 = vmatpush1.bf16.msra.mxu0 0
        %362 = vmatprep.subr.bf16.mxu0 0
        %363 = vmatpush1.bf16.msra.mxu0 0
        %364 = vmatprep.subr.bf16.mxu0 0
        %365 = vmatpush1.bf16.msra.mxu0 0
        %366 = vmatprep.subr.bf16.mxu0 0
        %367 = vmatpush1.bf16.msra.mxu0 0
        %368 = vmatprep.subr.bf16.mxu0 0
        %369 = vmatpush1.bf16.msra.mxu0 0
        %370 = vmatprep.mubr.bf16.mxu0 0
        %371 = vmatmul.mubr.bf16.gmra.mrb[0].mxu0 %v320
        %v372 = vpop.f32.mrb[0].mxu0
        %v373 = vadd.f32 %v274, %v372
        %v374 = vpop.f32.mrb[0].mxu0
        %v375 = vadd.f32 %v278, %v374
        %v376 = vpop.f32.mrb[0].mxu0
        %v377 = vadd.f32 %v274, %v376
        %v378 = vpop.f32.mrb[0].mxu0
        %v379 = vadd.f32 %v278, %v378
        %380 = vmatprep.mubr.bf16.mxu0 0
        %381 = vmatmul.mubr.bf16.gmra.mrb[0].mxu0 %v323
        %v382 = vpop.f32.mrb[0].mxu0
        %v383 = vadd.f32 %v274, %v382
        %v384 = vpop.f32.mrb[0].mxu0
        %v385 = vadd.f32 %v278, %v384
        %v386 = vpop.f32.mrb[0].mxu0
        %v387 = vadd.f32 %v274, %v386
        %v388 = vpop.f32.mrb[0].mxu0
        %v389 = vadd.f32 %v278, %v388
        %390 = vmatprep.mubr.bf16.mxu0 0
        %391 = vmatmul.mubr.bf16.gmra.mrb[0].mxu0 %v326
        %v392 = vpop.f32.mrb[0].mxu0
        %v393 = vadd.f32 %v274, %v392
        %v394 = vpop.f32.mrb[0].mxu0
        %v395 = vadd.f32 %v278, %v394
        %v396 = vpop.f32.mrb[0].mxu0
        %v397 = vadd.f32 %v274, %v396
        %v398 = vpop.f32.mrb[0].mxu0
        %v399 = vadd.f32 %v278, %v398
        %400 = vdwg.mxu0
        %401 = vmatprep.subr.bf16.mxu0 0
        %402 = vmatpush1.bf16.msra.mxu0 %v336
        %403 = vmatprep.subr.bf16.mxu0 0
        %404 = vmatpush1.bf16.msra.mxu0 0
        %405 = vmatprep.subr.bf16.mxu0 0
        %406 = vmatpush1.bf16.msra.mxu0 0
        %407 = vmatprep.subr.bf16.mxu0 0
        %408 = vmatpush1.bf16.msra.mxu0 0
        %409 = vmatprep.subr.bf16.mxu0 0
        %410 = vmatpush1.bf16.msra.mxu0 0
        %411 = vmatprep.subr.bf16.mxu0 0
        %412 = vmatpush1.bf16.msra.mxu0 0
        %413 = vmatprep.subr.bf16.mxu0 0
        %414 = vmatpush1.bf16.msra.mxu0 0
        %415 = vmatprep.subr.bf16.mxu0 0
        %416 = vmatpush1.bf16.msra.mxu0 0
        %417 = vmatprep.subr.bf16.mxu0 0
        %418 = vmatpush1.bf16.msra.mxu0 0
        %419 = vmatprep.subr.bf16.mxu0 0
        %420 = vmatpush1.bf16.msra.mxu0 0
        %421 = vmatprep.subr.bf16.mxu0 0
        %422 = vmatpush1.bf16.msra.mxu0 0
        %423 = vmatprep.subr.bf16.mxu0 0
        %424 = vmatpush1.bf16.msra.mxu0 0
        %425 = vmatprep.subr.bf16.mxu0 0
        %426 = vmatpush1.bf16.msra.mxu0 0
        %427 = vmatprep.subr.bf16.mxu0 0
        %428 = vmatpush1.bf16.msra.mxu0 0
        %429 = vmatprep.subr.bf16.mxu0 0
        %430 = vmatpush1.bf16.msra.mxu0 0
        %431 = vmatprep.subr.bf16.mxu0 0
        %432 = vmatpush1.bf16.msra.mxu0 0
        %433 = vmatprep.mubr.bf16.mxu0 0
        %434 = vmatmul.mubr.bf16.gmra.mrb[0].mxu0 %v320
        %v435 = vpop.f32.mrb[0].mxu0
        %v436 = vadd.f32 %v282, %v435
        %v437 = vpop.f32.mrb[0].mxu0
        %v438 = vpop.f32.mrb[0].mxu0
        %v439 = vadd.f32 %v282, %v438
        %v440 = vpop.f32.mrb[0].mxu0
        %441 = vmatprep.mubr.bf16.mxu0 0
        %442 = vmatmul.mubr.bf16.gmra.mrb[0].mxu0 %v323
        %v443 = vpop.f32.mrb[0].mxu0
        %v444 = vadd.f32 %v282, %v443
        %v445 = vpop.f32.mrb[0].mxu0
        %v446 = vpop.f32.mrb[0].mxu0
        %v447 = vadd.f32 %v282, %v446
        %v448 = vpop.f32.mrb[0].mxu0
        %449 = vmatprep.mubr.bf16.mxu0 0
        %450 = vmatmul.mubr.bf16.gmra.mrb[0].mxu0 %v326
        %v451 = vpop.f32.mrb[0].mxu0
        %v452 = vadd.f32 %v282, %v451
        %v453 = vpop.f32.mrb[0].mxu0
        %v454 = vpop.f32.mrb[0].mxu0
        %v455 = vadd.f32 %v282, %v454
        %v456 = vpop.f32.mrb[0].mxu0
        %457 = vdwg.mxu0
        %458 = vst [vmem:[#allocation2] sm:$0xff] %v373
        %459 = vst [vmem:[#allocation2 + $0x8] sm:$0xff] %v375
        %460 = vst [vmem:[#allocation2 + $0x10] sm:$0xff] %v436
        %461 = vst [vmem:[#allocation2 + $0x18] sm:$0xff] %v377
        %462 = vst [vmem:[#allocation2 + $0x20] sm:$0xff] %v379
        %463 = vst [vmem:[#allocation2 + $0x28] sm:$0xff] %v439
        %464 = vst [vmem:[#allocation2 + $0x30] sm:$0xff] %v383
        %465 = vst [vmem:[#allocation2 + $0x38] sm:$0xff] %v385
        %466 = vst [vmem:[#allocation2 + $0x40] sm:$0xff] %v444
        %467 = vst [vmem:[#allocation2 + $0x48] sm:$0xff] %v387
        %468 = vst [vmem:[#allocation2 + $0x50] sm:$0xff] %v389
        %469 = vst [vmem:[#allocation2 + $0x58] sm:$0xff] %v447
        %470 = vst [vmem:[#allocation2 + $0x60] sm:$0xff] %v393
        %471 = vst [vmem:[#allocation2 + $0x68] sm:$0xff] %v395
        %472 = vst [vmem:[#allocation2 + $0x70] sm:$0xff] %v452
        %473 = vst [vmem:[#allocation2 + $0x78] sm:$0xff] %v397
        %474 = vst [vmem:[#allocation2 + $0x80] sm:$0xff] %v399
        %475 = vst [vmem:[#allocation2 + $0x88] sm:$0xff] %v455
        %v476 = vld [vmem:[#allocation3] sm:$0xff]
        %v477 = vld [vmem:[#allocation3 + $0x8] sm:$0xf]
        %v478 = vld [vmem:[#allocation3 + $0xc] sm:$0xff]
        %v479 = vld [vmem:[#allocation3 + $0x14] sm:$0xf]
        %v480 = vld [vmem:[#allocation3 + $0x18] sm:$0xff]
        %v481 = vld [vmem:[#allocation3 + $0x20] sm:$0xf]
        %v482 = vld [vmem:[#allocation3 + $0x24] sm:$0xff]
        %v483 = vld [vmem:[#allocation3 + $0x2c] sm:$0xf]
        %v484 = vld [vmem:[#allocation3 + $0x30] sm:$0xff]
        %v485 = vld [vmem:[#allocation3 + $0x38] sm:$0xf]
        %v486 = vld [vmem:[#allocation3 + $0x3c] sm:$0xff]
        %v487 = vld [vmem:[#allocation3 + $0x44] sm:$0xf]
        %v488 = vld [vmem:[#allocation3 + $0x48] sm:$0xff]
        %v489 = vld [vmem:[#allocation3 + $0x50] sm:$0xf]
        %v490 = vld [vmem:[#allocation3 + $0x54] sm:$0xff]
        %v491 = vld [vmem:[#allocation3 + $0x5c] sm:$0xf]
        %v492 = vld [vmem:[#allocation3 + $0x60] sm:$0xff]
        %v493 = vld [vmem:[#allocation3 + $0x68] sm:$0xf]
        %v494 = vld [vmem:[#allocation3 + $0x6c] sm:$0xff]
        %v495 = vld [vmem:[#allocation3 + $0x74] sm:$0xf]
        %v496 = vld [vmem:[#allocation3 + $0x78] sm:$0xff]
        %v497 = vld [vmem:[#allocation3 + $0x80] sm:$0xf]
        %v498 = vld [vmem:[#allocation3 + $0x84] sm:$0xff]
        %v499 = vld [vmem:[#allocation3 + $0x8c] sm:$0xf]
        %v500 = vld [vmem:[#allocation3 + $0x90] sm:$0xff]
        %v501 = vld [vmem:[#allocation3 + $0x98] sm:$0xf]
        %v502 = vld [vmem:[#allocation3 + $0x9c] sm:$0xff]
        %v503 = vld [vmem:[#allocation3 + $0xa4] sm:$0xf]
        %v504 = vld [vmem:[#allocation3 + $0xa8] sm:$0xff]
        %v505 = vld [vmem:[#allocation3 + $0xb0] sm:$0xf]
        %v506 = vld [vmem:[#allocation3 + $0xb4] sm:$0xff]
        %v507 = vld [vmem:[#allocation3 + $0xbc] sm:$0xf]
        %v508 = vld [vmem:[%s4] sm:$0x1]
        %s509 = smul.u32 %s23, 6
        %v510 = vld [vmem:[#allocation6] sm:$0xff]
        %s511 = smul.u32 0, 3
        %s512 = smul.addr %s511, 8
        %s513 = scalar_lea.vmem [#allocation2], %s512
        %v514 = vld [vmem:[%s513] sm:$0xff]
        %v515 = vld [vmem:[%s513 + $0x8] sm:$0xff]
        %v516 = vld [vmem:[%s513 + $0x10] sm:$0xff]
        %v517 = vpack.c.bf16 %v510, %v510
        %v550 = vunpack.c.l.b16 %v476
        %v551 = vunpack.c.h.b16 %v476
        %v552 = vunpack.c.l.b16 %v477
        %v553 = vunpack.c.l.b16 %v478
        %v554 = vunpack.c.h.b16 %v478
        %v555 = vunpack.c.l.b16 %v479
        %v556 = vunpack.c.l.b16 %v480
        %v557 = vunpack.c.h.b16 %v480
        %v558 = vunpack.c.l.b16 %v481
        %v559 = vunpack.c.l.b16 %v482
        %v560 = vunpack.c.h.b16 %v482
        %v561 = vunpack.c.l.b16 %v483
        %v562 = vunpack.c.l.b16 %v484
        %v563 = vunpack.c.h.b16 %v484
        %v564 = vunpack.c.l.b16 %v485
        %v565 = vunpack.c.l.b16 %v486
        %v566 = vunpack.c.h.b16 %v486
        %v567 = vunpack.c.l.b16 %v487
        %v568 = vunpack.c.l.b16 %v488
        %v569 = vunpack.c.h.b16 %v488
        %v570 = vunpack.c.l.b16 %v489
        %v571 = vunpack.c.l.b16 %v490
        %v572 = vunpack.c.h.b16 %v490
        %v573 = vunpack.c.l.b16 %v491
        %v574 = vunpack.c.l.b16 %v492
        %v575 = vunpack.c.h.b16 %v492
        %v576 = vunpack.c.l.b16 %v493
        %v577 = vunpack.c.l.b16 %v494
        %v578 = vunpack.c.h.b16 %v494
        %v579 = vunpack.c.l.b16 %v495
        %v580 = vunpack.c.l.b16 %v496
        %v581 = vunpack.c.h.b16 %v496
        %v582 = vunpack.c.l.b16 %v497
        %v583 = vunpack.c.l.b16 %v498
        %v584 = vunpack.c.h.b16 %v498
        %v585 = vunpack.c.l.b16 %v499
        %v586 = vunpack.c.l.b16 %v500
        %v587 = vunpack.c.h.b16 %v500
        %v588 = vunpack.c.l.b16 %v501
        %v589 = vunpack.c.l.b16 %v502
        %v590 = vunpack.c.h.b16 %v502
        %v591 = vunpack.c.l.b16 %v503
        %v592 = vunpack.c.l.b16 %v504
        %v593 = vunpack.c.h.b16 %v504
        %v594 = vunpack.c.l.b16 %v505
        %v595 = vunpack.c.l.b16 %v506
        %v596 = vunpack.c.h.b16 %v506
        %v597 = vunpack.c.l.b16 %v507
        %v598 = vpack.c.b16 %v553, %v550
        %v599 = vpack.c.b16 %v554, %v551
        %v600 = vpack.c.b16 %v555, %v552
        %v601 = vpack.c.b16 %v559, %v556
        %v602 = vpack.c.b16 %v560, %v557
        %v603 = vpack.c.b16 %v561, %v558
        %v604 = vpack.c.b16 %v565, %v562
        %v605 = vpack.c.b16 %v566, %v563
        %v606 = vpack.c.b16 %v567, %v564
        %v607 = vpack.c.b16 %v571, %v568
        %v608 = vpack.c.b16 %v572, %v569
        %v609 = vpack.c.b16 %v573, %v570
        %v610 = vpack.c.b16 %v577, %v574
        %v611 = vpack.c.b16 %v578, %v575
        %v612 = vpack.c.b16 %v579, %v576
        %v613 = vpack.c.b16 %v583, %v580
        %v614 = vpack.c.b16 %v584, %v581
        %v615 = vpack.c.b16 %v585, %v582
        %v616 = vpack.c.b16 %v589, %v586
        %v617 = vpack.c.b16 %v590, %v587
        %v618 = vpack.c.b16 %v591, %v588
        %v619 = vpack.c.b16 %v595, %v592
        %v620 = vpack.c.b16 %v596, %v593
        %v621 = vpack.c.b16 %v597, %v594
        %646 = vmatprep.subr.bf16.mxu0 %v599
        %647 = vmatpush1.bf16.msra.mxu0 %v598
        %648 = vmatprep.subr.bf16.mxu0 %v602
        %649 = vmatpush1.bf16.msra.mxu0 %v601
        %650 = vmatprep.subr.bf16.mxu0 %v605
        %651 = vmatpush1.bf16.msra.mxu0 %v604
        %652 = vmatprep.subr.bf16.mxu0 %v608
        %653 = vmatpush1.bf16.msra.mxu0 %v607
        %654 = vmatprep.subr.bf16.mxu0 %v611
        %655 = vmatpush1.bf16.msra.mxu0 %v610
        %656 = vmatprep.subr.bf16.mxu0 %v614
        %657 = vmatpush1.bf16.msra.mxu0 %v613
        %658 = vmatprep.subr.bf16.mxu0 %v617
        %659 = vmatpush1.bf16.msra.mxu0 %v616
        %660 = vmatprep.subr.bf16.mxu0 %v620
        %661 = vmatpush1.bf16.msra.mxu0 %v619
        %662 = vmatprep.subr.bf16.mxu0 0
        %663 = vmatpush1.bf16.msra.mxu0 0
        %664 = vmatprep.subr.bf16.mxu0 0
        %665 = vmatpush1.bf16.msra.mxu0 0
        %666 = vmatprep.subr.bf16.mxu0 0
        %667 = vmatpush1.bf16.msra.mxu0 0
        %668 = vmatprep.subr.bf16.mxu0 0
        %669 = vmatpush1.bf16.msra.mxu0 0
        %670 = vmatprep.subr.bf16.mxu0 0
        %671 = vmatpush1.bf16.msra.mxu0 0
        %672 = vmatprep.subr.bf16.mxu0 0
        %673 = vmatpush1.bf16.msra.mxu0 0
        %674 = vmatprep.subr.bf16.mxu0 0
        %675 = vmatpush1.bf16.msra.mxu0 0
        %676 = vmatprep.subr.bf16.mxu0 0
        %677 = vmatpush1.bf16.msra.mxu0 0
        %678 = vmatprep.mubr.bf16.mxu0 0
        %679 = vmatmul.mubr.bf16.gmra.mrb[0].mxu0 %v517
        %v680 = vpop.f32.mrb[0].mxu0
        %v681 = vadd.f32 0.0, %v680
        %v682 = vpop.f32.mrb[0].mxu0
        %v683 = vadd.f32 0.0, %v682
        %v684 = vpop.f32.mrb[0].mxu0
        %v685 = vpop.f32.mrb[0].mxu0
        %686 = vdwg.mxu0
        %687 = vmatprep.subr.bf16.mxu0 0
        %688 = vmatpush1.bf16.msra.mxu0 %v600
        %689 = vmatprep.subr.bf16.mxu0 0
        %690 = vmatpush1.bf16.msra.mxu0 %v603
        %691 = vmatprep.subr.bf16.mxu0 0
        %692 = vmatpush1.bf16.msra.mxu0 %v606
        %693 = vmatprep.subr.bf16.mxu0 0
        %694 = vmatpush1.bf16.msra.mxu0 %v609
        %695 = vmatprep.subr.bf16.mxu0 0
        %696 = vmatpush1.bf16.msra.mxu0 %v612
        %697 = vmatprep.subr.bf16.mxu0 0
        %698 = vmatpush1.bf16.msra.mxu0 %v615
        %699 = vmatprep.subr.bf16.mxu0 0
        %700 = vmatpush1.bf16.msra.mxu0 %v618
        %701 = vmatprep.subr.bf16.mxu0 0
        %702 = vmatpush1.bf16.msra.mxu0 %v621
        %703 = vmatprep.subr.bf16.mxu0 0
        %704 = vmatpush1.bf16.msra.mxu0 0
        %705 = vmatprep.subr.bf16.mxu0 0
        %706 = vmatpush1.bf16.msra.mxu0 0
        %707 = vmatprep.subr.bf16.mxu0 0
        %708 = vmatpush1.bf16.msra.mxu0 0
        %709 = vmatprep.subr.bf16.mxu0 0
        %710 = vmatpush1.bf16.msra.mxu0 0
        %711 = vmatprep.subr.bf16.mxu0 0
        %712 = vmatpush1.bf16.msra.mxu0 0
        %713 = vmatprep.subr.bf16.mxu0 0
        %714 = vmatpush1.bf16.msra.mxu0 0
        %715 = vmatprep.subr.bf16.mxu0 0
        %716 = vmatpush1.bf16.msra.mxu0 0
        %717 = vmatprep.subr.bf16.mxu0 0
        %718 = vmatpush1.bf16.msra.mxu0 0
        %719 = vmatprep.mubr.bf16.mxu0 0
        %720 = vmatmul.mubr.bf16.gmra.mrb[0].mxu0 %v517
        %v721 = vpop.f32.mrb[0].mxu0
        %v722 = vadd.f32 0.0, %v721
        %v723 = vpop.f32.mrb[0].mxu0
        %v724 = vpop.f32.mrb[0].mxu0
        %v725 = vpop.f32.mrb[0].mxu0
        %726 = vdwg.mxu0
        %v727 = vadd.f32 %v514, %v681
        %v728 = vxor.u32 %v727, 2147483648
        %v729 = vmul.f32 %v728, 1.442695
        %v730 = vpow.pop %v729
        %v731 = vadd.f32 %v730, 1.0
        %v732 = vrcp.pop %v731
        %v733 = vmul.f32 1.0, %v732
        %v734 = vadd.f32 %v515, %v683
        %v735 = vxor.u32 %v734, 2147483648
        %v736 = vmul.f32 %v735, 1.442695
        %v737 = vpow.pop %v736
        %v738 = vadd.f32 %v737, 1.0
        %v739 = vrcp.pop %v738
        %v740 = vmul.f32 1.0, %v739
        %v742 = vlaneseq
        %v743 = vshrl.u32 %v742, 7
        %v744 = vsub.s32 0, %v743
        %v745 = vrot.slane %v508, %v744
        %v747 = vadd.f32 %v722, %v745
        %v748 = vmul.f32 %v733, %v747
        %v749 = vadd.f32 %v516, %v748
        %v750 = vtanh.pop %v749
        %v751 = vsub.f32 1.0, %v740
        %v752 = vmul.f32 %v751, %v750
        %v753 = vmul.f32 %v740, %v510
        %v754 = vadd.f32 %v752, %v753
        %p755 = scmp.lt.s32.totalorder %s509, 16
        %s756 = scalar_select %p755, 1, 0
        %v757 = vstv %s756
        %vm758 = vcmp.eq.s32.totalorder %v757, 1
        %v759 = vsel %vm758, %v754, %v510
        %s760 = smul.u32 1, 3
        %s761 = smul.addr %s760, 8
        %s762 = scalar_lea.vmem [#allocation2], %s761
        %v763 = vld [vmem:[%s762] sm:$0xff]
        %v764 = vld [vmem:[%s762 + $0x8] sm:$0xff]
        %v765 = vld [vmem:[%s762 + $0x10] sm:$0xff]
        %v766 = vpack.c.bf16 %v759, %v759
        %767 = vmatprep.subr.bf16.mxu0 %v599
        %768 = vmatpush1.bf16.msra.mxu0 %v598
        %769 = vmatprep.subr.bf16.mxu0 %v602
        %770 = vmatpush1.bf16.msra.mxu0 %v601
        %771 = vmatprep.subr.bf16.mxu0 %v605
        %772 = vmatpush1.bf16.msra.mxu0 %v604
        %773 = vmatprep.subr.bf16.mxu0 %v608
        %774 = vmatpush1.bf16.msra.mxu0 %v607
        %775 = vmatprep.subr.bf16.mxu0 %v611
        %776 = vmatpush1.bf16.msra.mxu0 %v610
        %777 = vmatprep.subr.bf16.mxu0 %v614
        %778 = vmatpush1.bf16.msra.mxu0 %v613
        %779 = vmatprep.subr.bf16.mxu0 %v617
        %780 = vmatpush1.bf16.msra.mxu0 %v616
        %781 = vmatprep.subr.bf16.mxu0 %v620
        %782 = vmatpush1.bf16.msra.mxu0 %v619
        %783 = vmatprep.subr.bf16.mxu0 0
        %784 = vmatpush1.bf16.msra.mxu0 0
        %785 = vmatprep.subr.bf16.mxu0 0
        %786 = vmatpush1.bf16.msra.mxu0 0
        %787 = vmatprep.subr.bf16.mxu0 0
        %788 = vmatpush1.bf16.msra.mxu0 0
        %789 = vmatprep.subr.bf16.mxu0 0
        %790 = vmatpush1.bf16.msra.mxu0 0
        %791 = vmatprep.subr.bf16.mxu0 0
        %792 = vmatpush1.bf16.msra.mxu0 0
        %793 = vmatprep.subr.bf16.mxu0 0
        %794 = vmatpush1.bf16.msra.mxu0 0
        %795 = vmatprep.subr.bf16.mxu0 0
        %796 = vmatpush1.bf16.msra.mxu0 0
        %797 = vmatprep.subr.bf16.mxu0 0
        %798 = vmatpush1.bf16.msra.mxu0 0
        %799 = vmatprep.mubr.bf16.mxu0 0
        %800 = vmatmul.mubr.bf16.gmra.mrb[0].mxu0 %v766
        %v801 = vpop.f32.mrb[0].mxu0
        %v802 = vadd.f32 0.0, %v801
        %v803 = vpop.f32.mrb[0].mxu0
        %v804 = vadd.f32 0.0, %v803
        %v805 = vpop.f32.mrb[0].mxu0
        %v806 = vpop.f32.mrb[0].mxu0
        %807 = vdwg.mxu0
        %808 = vmatprep.subr.bf16.mxu0 0
        %809 = vmatpush1.bf16.msra.mxu0 %v600
        %810 = vmatprep.subr.bf16.mxu0 0
        %811 = vmatpush1.bf16.msra.mxu0 %v603
        %812 = vmatprep.subr.bf16.mxu0 0
        %813 = vmatpush1.bf16.msra.mxu0 %v606
        %814 = vmatprep.subr.bf16.mxu0 0
        %815 = vmatpush1.bf16.msra.mxu0 %v609
        %816 = vmatprep.subr.bf16.mxu0 0
        %817 = vmatpush1.bf16.msra.mxu0 %v612
        %818 = vmatprep.subr.bf16.mxu0 0
        %819 = vmatpush1.bf16.msra.mxu0 %v615
        %820 = vmatprep.subr.bf16.mxu0 0
        %821 = vmatpush1.bf16.msra.mxu0 %v618
        %822 = vmatprep.subr.bf16.mxu0 0
        %823 = vmatpush1.bf16.msra.mxu0 %v621
        %824 = vmatprep.subr.bf16.mxu0 0
        %825 = vmatpush1.bf16.msra.mxu0 0
        %826 = vmatprep.subr.bf16.mxu0 0
        %827 = vmatpush1.bf16.msra.mxu0 0
        %828 = vmatprep.subr.bf16.mxu0 0
        %829 = vmatpush1.bf16.msra.mxu0 0
        %830 = vmatprep.subr.bf16.mxu0 0
        %831 = vmatpush1.bf16.msra.mxu0 0
        %832 = vmatprep.subr.bf16.mxu0 0
        %833 = vmatpush1.bf16.msra.mxu0 0
        %834 = vmatprep.subr.bf16.mxu0 0
        %835 = vmatpush1.bf16.msra.mxu0 0
        %836 = vmatprep.subr.bf16.mxu0 0
        %837 = vmatpush1.bf16.msra.mxu0 0
        %838 = vmatprep.subr.bf16.mxu0 0
        %839 = vmatpush1.bf16.msra.mxu0 0
        %840 = vmatprep.mubr.bf16.mxu0 0
        %841 = vmatmul.mubr.bf16.gmra.mrb[0].mxu0 %v766
        %v842 = vpop.f32.mrb[0].mxu0
        %v843 = vadd.f32 0.0, %v842
        %v844 = vpop.f32.mrb[0].mxu0
        %v845 = vpop.f32.mrb[0].mxu0
        %v846 = vpop.f32.mrb[0].mxu0
        %847 = vdwg.mxu0
        %v848 = vadd.f32 %v763, %v802
        %v849 = vxor.u32 %v848, 2147483648
        %v850 = vmul.f32 %v849, 1.442695
        %v851 = vpow.pop %v850
        %v852 = vadd.f32 %v851, 1.0
        %v853 = vrcp.pop %v852
        %v854 = vmul.f32 1.0, %v853
        %v855 = vadd.f32 %v764, %v804
        %v856 = vxor.u32 %v855, 2147483648
        %v857 = vmul.f32 %v856, 1.442695
        %v858 = vpow.pop %v857
        %v859 = vadd.f32 %v858, 1.0
        %v860 = vrcp.pop %v859
        %v861 = vmul.f32 1.0, %v860
        %v862 = vadd.f32 %v843, %v745
        %v863 = vmul.f32 %v854, %v862
        %v864 = vadd.f32 %v765, %v863
        %v865 = vtanh.pop %v864
        %v866 = vsub.f32 1.0, %v861
        %v867 = vmul.f32 %v866, %v865
        %v868 = vmul.f32 %v861, %v759
        %v869 = vadd.f32 %v867, %v868
        %s870 = sadd.s32 %s509, 1
        %p871 = scmp.lt.s32.totalorder %s870, 16
        %s872 = scalar_select %p871, 1, 0
        %v873 = vstv %s872
        %vm874 = vcmp.eq.s32.totalorder %v873, 1
        %v875 = vsel %vm874, %v869, %v759
        %s876 = smul.u32 2, 3
        %s877 = smul.addr %s876, 8
        %s878 = scalar_lea.vmem [#allocation2], %s877
        %v879 = vld [vmem:[%s878] sm:$0xff]
        %v880 = vld [vmem:[%s878 + $0x8] sm:$0xff]
        %v881 = vld [vmem:[%s878 + $0x10] sm:$0xff]
        %v882 = vpack.c.bf16 %v875, %v875
        %883 = vmatprep.subr.bf16.mxu0 %v599
        %884 = vmatpush1.bf16.msra.mxu0 %v598
        %885 = vmatprep.subr.bf16.mxu0 %v602
        %886 = vmatpush1.bf16.msra.mxu0 %v601
        %887 = vmatprep.subr.bf16.mxu0 %v605
        %888 = vmatpush1.bf16.msra.mxu0 %v604
        %889 = vmatprep.subr.bf16.mxu0 %v608
        %890 = vmatpush1.bf16.msra.mxu0 %v607
        %891 = vmatprep.subr.bf16.mxu0 %v611
        %892 = vmatpush1.bf16.msra.mxu0 %v610
        %893 = vmatprep.subr.bf16.mxu0 %v614
        %894 = vmatpush1.bf16.msra.mxu0 %v613
        %895 = vmatprep.subr.bf16.mxu0 %v617
        %896 = vmatpush1.bf16.msra.mxu0 %v616
        %897 = vmatprep.subr.bf16.mxu0 %v620
        %898 = vmatpush1.bf16.msra.mxu0 %v619
        %899 = vmatprep.subr.bf16.mxu0 0
        %900 = vmatpush1.bf16.msra.mxu0 0
        %901 = vmatprep.subr.bf16.mxu0 0
        %902 = vmatpush1.bf16.msra.mxu0 0
        %903 = vmatprep.subr.bf16.mxu0 0
        %904 = vmatpush1.bf16.msra.mxu0 0
        %905 = vmatprep.subr.bf16.mxu0 0
        %906 = vmatpush1.bf16.msra.mxu0 0
        %907 = vmatprep.subr.bf16.mxu0 0
        %908 = vmatpush1.bf16.msra.mxu0 0
        %909 = vmatprep.subr.bf16.mxu0 0
        %910 = vmatpush1.bf16.msra.mxu0 0
        %911 = vmatprep.subr.bf16.mxu0 0
        %912 = vmatpush1.bf16.msra.mxu0 0
        %913 = vmatprep.subr.bf16.mxu0 0
        %914 = vmatpush1.bf16.msra.mxu0 0
        %915 = vmatprep.mubr.bf16.mxu0 0
        %916 = vmatmul.mubr.bf16.gmra.mrb[0].mxu0 %v882
        %v917 = vpop.f32.mrb[0].mxu0
        %v918 = vadd.f32 0.0, %v917
        %v919 = vpop.f32.mrb[0].mxu0
        %v920 = vadd.f32 0.0, %v919
        %v921 = vpop.f32.mrb[0].mxu0
        %v922 = vpop.f32.mrb[0].mxu0
        %923 = vdwg.mxu0
        %924 = vmatprep.subr.bf16.mxu0 0
        %925 = vmatpush1.bf16.msra.mxu0 %v600
        %926 = vmatprep.subr.bf16.mxu0 0
        %927 = vmatpush1.bf16.msra.mxu0 %v603
        %928 = vmatprep.subr.bf16.mxu0 0
        %929 = vmatpush1.bf16.msra.mxu0 %v606
        %930 = vmatprep.subr.bf16.mxu0 0
        %931 = vmatpush1.bf16.msra.mxu0 %v609
        %932 = vmatprep.subr.bf16.mxu0 0
        %933 = vmatpush1.bf16.msra.mxu0 %v612
        %934 = vmatprep.subr.bf16.mxu0 0
        %935 = vmatpush1.bf16.msra.mxu0 %v615
        %936 = vmatprep.subr.bf16.mxu0 0
        %937 = vmatpush1.bf16.msra.mxu0 %v618
        %938 = vmatprep.subr.bf16.mxu0 0
        %939 = vmatpush1.bf16.msra.mxu0 %v621
        %940 = vmatprep.subr.bf16.mxu0 0
        %941 = vmatpush1.bf16.msra.mxu0 0
        %942 = vmatprep.subr.bf16.mxu0 0
        %943 = vmatpush1.bf16.msra.mxu0 0
        %944 = vmatprep.subr.bf16.mxu0 0
        %945 = vmatpush1.bf16.msra.mxu0 0
        %946 = vmatprep.subr.bf16.mxu0 0
        %947 = vmatpush1.bf16.msra.mxu0 0
        %948 = vmatprep.subr.bf16.mxu0 0
        %949 = vmatpush1.bf16.msra.mxu0 0
        %950 = vmatprep.subr.bf16.mxu0 0
        %951 = vmatpush1.bf16.msra.mxu0 0
        %952 = vmatprep.subr.bf16.mxu0 0
        %953 = vmatpush1.bf16.msra.mxu0 0
        %954 = vmatprep.subr.bf16.mxu0 0
        %955 = vmatpush1.bf16.msra.mxu0 0
        %956 = vmatprep.mubr.bf16.mxu0 0
        %957 = vmatmul.mubr.bf16.gmra.mrb[0].mxu0 %v882
        %v958 = vpop.f32.mrb[0].mxu0
        %v959 = vadd.f32 0.0, %v958
        %v960 = vpop.f32.mrb[0].mxu0
        %v961 = vpop.f32.mrb[0].mxu0
        %v962 = vpop.f32.mrb[0].mxu0
        %963 = vdwg.mxu0
        %v964 = vadd.f32 %v879, %v918
        %v965 = vxor.u32 %v964, 2147483648
        %v966 = vmul.f32 %v965, 1.442695
        %v967 = vpow.pop %v966
        %v968 = vadd.f32 %v967, 1.0
        %v969 = vrcp.pop %v968
        %v970 = vmul.f32 1.0, %v969
        %v971 = vadd.f32 %v880, %v920
        %v972 = vxor.u32 %v971, 2147483648
        %v973 = vmul.f32 %v972, 1.442695
        %v974 = vpow.pop %v973
        %v975 = vadd.f32 %v974, 1.0
        %v976 = vrcp.pop %v975
        %v977 = vmul.f32 1.0, %v976
        %v978 = vadd.f32 %v959, %v745
        %v979 = vmul.f32 %v970, %v978
        %v980 = vadd.f32 %v881, %v979
        %v981 = vtanh.pop %v980
        %v982 = vsub.f32 1.0, %v977
        %v983 = vmul.f32 %v982, %v981
        %v984 = vmul.f32 %v977, %v875
        %v985 = vadd.f32 %v983, %v984
        %s986 = sadd.s32 %s509, 2
        %p987 = scmp.lt.s32.totalorder %s986, 16
        %s988 = scalar_select %p987, 1, 0
        %v989 = vstv %s988
        %vm990 = vcmp.eq.s32.totalorder %v989, 1
        %v991 = vsel %vm990, %v985, %v875
        %s992 = smul.u32 3, 3
        %s993 = smul.addr %s992, 8
        %s994 = scalar_lea.vmem [#allocation2], %s993
        %v995 = vld [vmem:[%s994] sm:$0xff]
        %v996 = vld [vmem:[%s994 + $0x8] sm:$0xff]
        %v997 = vld [vmem:[%s994 + $0x10] sm:$0xff]
        %v998 = vpack.c.bf16 %v991, %v991
        %999 = vmatprep.subr.bf16.mxu0 %v599
        %1000 = vmatpush1.bf16.msra.mxu0 %v598
        %1001 = vmatprep.subr.bf16.mxu0 %v602
        %1002 = vmatpush1.bf16.msra.mxu0 %v601
        %1003 = vmatprep.subr.bf16.mxu0 %v605
        %1004 = vmatpush1.bf16.msra.mxu0 %v604
        %1005 = vmatprep.subr.bf16.mxu0 %v608
        %1006 = vmatpush1.bf16.msra.mxu0 %v607
        %1007 = vmatprep.subr.bf16.mxu0 %v611
        %1008 = vmatpush1.bf16.msra.mxu0 %v610
        %1009 = vmatprep.subr.bf16.mxu0 %v614
        %1010 = vmatpush1.bf16.msra.mxu0 %v613
        %1011 = vmatprep.subr.bf16.mxu0 %v617
        %1012 = vmatpush1.bf16.msra.mxu0 %v616
        %1013 = vmatprep.subr.bf16.mxu0 %v620
        %1014 = vmatpush1.bf16.msra.mxu0 %v619
        %1015 = vmatprep.subr.bf16.mxu0 0
        %1016 = vmatpush1.bf16.msra.mxu0 0
        %1017 = vmatprep.subr.bf16.mxu0 0
        %1018 = vmatpush1.bf16.msra.mxu0 0
        %1019 = vmatprep.subr.bf16.mxu0 0
        %1020 = vmatpush1.bf16.msra.mxu0 0
        %1021 = vmatprep.subr.bf16.mxu0 0
        %1022 = vmatpush1.bf16.msra.mxu0 0
        %1023 = vmatprep.subr.bf16.mxu0 0
        %1024 = vmatpush1.bf16.msra.mxu0 0
        %1025 = vmatprep.subr.bf16.mxu0 0
        %1026 = vmatpush1.bf16.msra.mxu0 0
        %1027 = vmatprep.subr.bf16.mxu0 0
        %1028 = vmatpush1.bf16.msra.mxu0 0
        %1029 = vmatprep.subr.bf16.mxu0 0
        %1030 = vmatpush1.bf16.msra.mxu0 0
        %1031 = vmatprep.mubr.bf16.mxu0 0
        %1032 = vmatmul.mubr.bf16.gmra.mrb[0].mxu0 %v998
        %v1033 = vpop.f32.mrb[0].mxu0
        %v1034 = vadd.f32 0.0, %v1033
        %v1035 = vpop.f32.mrb[0].mxu0
        %v1036 = vadd.f32 0.0, %v1035
        %v1037 = vpop.f32.mrb[0].mxu0
        %v1038 = vpop.f32.mrb[0].mxu0
        %1039 = vdwg.mxu0
        %1040 = vmatprep.subr.bf16.mxu0 0
        %1041 = vmatpush1.bf16.msra.mxu0 %v600
        %1042 = vmatprep.subr.bf16.mxu0 0
        %1043 = vmatpush1.bf16.msra.mxu0 %v603
        %1044 = vmatprep.subr.bf16.mxu0 0
        %1045 = vmatpush1.bf16.msra.mxu0 %v606
        %1046 = vmatprep.subr.bf16.mxu0 0
        %1047 = vmatpush1.bf16.msra.mxu0 %v609
        %1048 = vmatprep.subr.bf16.mxu0 0
        %1049 = vmatpush1.bf16.msra.mxu0 %v612
        %1050 = vmatprep.subr.bf16.mxu0 0
        %1051 = vmatpush1.bf16.msra.mxu0 %v615
        %1052 = vmatprep.subr.bf16.mxu0 0
        %1053 = vmatpush1.bf16.msra.mxu0 %v618
        %1054 = vmatprep.subr.bf16.mxu0 0
        %1055 = vmatpush1.bf16.msra.mxu0 %v621
        %1056 = vmatprep.subr.bf16.mxu0 0
        %1057 = vmatpush1.bf16.msra.mxu0 0
        %1058 = vmatprep.subr.bf16.mxu0 0
        %1059 = vmatpush1.bf16.msra.mxu0 0
        %1060 = vmatprep.subr.bf16.mxu0 0
        %1061 = vmatpush1.bf16.msra.mxu0 0
        %1062 = vmatprep.subr.bf16.mxu0 0
        %1063 = vmatpush1.bf16.msra.mxu0 0
        %1064 = vmatprep.subr.bf16.mxu0 0
        %1065 = vmatpush1.bf16.msra.mxu0 0
        %1066 = vmatprep.subr.bf16.mxu0 0
        %1067 = vmatpush1.bf16.msra.mxu0 0
        %1068 = vmatprep.subr.bf16.mxu0 0
        %1069 = vmatpush1.bf16.msra.mxu0 0
        %1070 = vmatprep.subr.bf16.mxu0 0
        %1071 = vmatpush1.bf16.msra.mxu0 0
        %1072 = vmatprep.mubr.bf16.mxu0 0
        %1073 = vmatmul.mubr.bf16.gmra.mrb[0].mxu0 %v998
        %v1074 = vpop.f32.mrb[0].mxu0
        %v1075 = vadd.f32 0.0, %v1074
        %v1076 = vpop.f32.mrb[0].mxu0
        %v1077 = vpop.f32.mrb[0].mxu0
        %v1078 = vpop.f32.mrb[0].mxu0
        %1079 = vdwg.mxu0
        %v1080 = vadd.f32 %v995, %v1034
        %v1081 = vxor.u32 %v1080, 2147483648
        %v1082 = vmul.f32 %v1081, 1.442695
        %v1083 = vpow.pop %v1082
        %v1084 = vadd.f32 %v1083, 1.0
        %v1085 = vrcp.pop %v1084
        %v1086 = vmul.f32 1.0, %v1085
        %v1087 = vadd.f32 %v996, %v1036
        %v1088 = vxor.u32 %v1087, 2147483648
        %v1089 = vmul.f32 %v1088, 1.442695
        %v1090 = vpow.pop %v1089
        %v1091 = vadd.f32 %v1090, 1.0
        %v1092 = vrcp.pop %v1091
        %v1093 = vmul.f32 1.0, %v1092
        %v1094 = vadd.f32 %v1075, %v745
        %v1095 = vmul.f32 %v1086, %v1094
        %v1096 = vadd.f32 %v997, %v1095
        %v1097 = vtanh.pop %v1096
        %v1098 = vsub.f32 1.0, %v1093
        %v1099 = vmul.f32 %v1098, %v1097
        %v1100 = vmul.f32 %v1093, %v991
        %v1101 = vadd.f32 %v1099, %v1100
        %s1102 = sadd.s32 %s509, 3
        %p1103 = scmp.lt.s32.totalorder %s1102, 16
        %s1104 = scalar_select %p1103, 1, 0
        %v1105 = vstv %s1104
        %vm1106 = vcmp.eq.s32.totalorder %v1105, 1
        %v1107 = vsel %vm1106, %v1101, %v991
        %s1108 = smul.u32 4, 3
        %s1109 = smul.addr %s1108, 8
        %s1110 = scalar_lea.vmem [#allocation2], %s1109
        %v1111 = vld [vmem:[%s1110] sm:$0xff]
        %v1112 = vld [vmem:[%s1110 + $0x8] sm:$0xff]
        %v1113 = vld [vmem:[%s1110 + $0x10] sm:$0xff]
        %v1114 = vpack.c.bf16 %v1107, %v1107
        %1115 = vmatprep.subr.bf16.mxu0 %v599
        %1116 = vmatpush1.bf16.msra.mxu0 %v598
        %1117 = vmatprep.subr.bf16.mxu0 %v602
        %1118 = vmatpush1.bf16.msra.mxu0 %v601
        %1119 = vmatprep.subr.bf16.mxu0 %v605
        %1120 = vmatpush1.bf16.msra.mxu0 %v604
        %1121 = vmatprep.subr.bf16.mxu0 %v608
        %1122 = vmatpush1.bf16.msra.mxu0 %v607
        %1123 = vmatprep.subr.bf16.mxu0 %v611
        %1124 = vmatpush1.bf16.msra.mxu0 %v610
        %1125 = vmatprep.subr.bf16.mxu0 %v614
        %1126 = vmatpush1.bf16.msra.mxu0 %v613
        %1127 = vmatprep.subr.bf16.mxu0 %v617
        %1128 = vmatpush1.bf16.msra.mxu0 %v616
        %1129 = vmatprep.subr.bf16.mxu0 %v620
        %1130 = vmatpush1.bf16.msra.mxu0 %v619
        %1131 = vmatprep.subr.bf16.mxu0 0
        %1132 = vmatpush1.bf16.msra.mxu0 0
        %1133 = vmatprep.subr.bf16.mxu0 0
        %1134 = vmatpush1.bf16.msra.mxu0 0
        %1135 = vmatprep.subr.bf16.mxu0 0
        %1136 = vmatpush1.bf16.msra.mxu0 0
        %1137 = vmatprep.subr.bf16.mxu0 0
        %1138 = vmatpush1.bf16.msra.mxu0 0
        %1139 = vmatprep.subr.bf16.mxu0 0
        %1140 = vmatpush1.bf16.msra.mxu0 0
        %1141 = vmatprep.subr.bf16.mxu0 0
        %1142 = vmatpush1.bf16.msra.mxu0 0
        %1143 = vmatprep.subr.bf16.mxu0 0
        %1144 = vmatpush1.bf16.msra.mxu0 0
        %1145 = vmatprep.subr.bf16.mxu0 0
        %1146 = vmatpush1.bf16.msra.mxu0 0
        %1147 = vmatprep.mubr.bf16.mxu0 0
        %1148 = vmatmul.mubr.bf16.gmra.mrb[0].mxu0 %v1114
        %v1149 = vpop.f32.mrb[0].mxu0
        %v1150 = vadd.f32 0.0, %v1149
        %v1151 = vpop.f32.mrb[0].mxu0
        %v1152 = vadd.f32 0.0, %v1151
        %v1153 = vpop.f32.mrb[0].mxu0
        %v1154 = vpop.f32.mrb[0].mxu0
        %1155 = vdwg.mxu0
        %1156 = vmatprep.subr.bf16.mxu0 0
        %1157 = vmatpush1.bf16.msra.mxu0 %v600
        %1158 = vmatprep.subr.bf16.mxu0 0
        %1159 = vmatpush1.bf16.msra.mxu0 %v603
        %1160 = vmatprep.subr.bf16.mxu0 0
        %1161 = vmatpush1.bf16.msra.mxu0 %v606
        %1162 = vmatprep.subr.bf16.mxu0 0
        %1163 = vmatpush1.bf16.msra.mxu0 %v609
        %1164 = vmatprep.subr.bf16.mxu0 0
        %1165 = vmatpush1.bf16.msra.mxu0 %v612
        %1166 = vmatprep.subr.bf16.mxu0 0
        %1167 = vmatpush1.bf16.msra.mxu0 %v615
        %1168 = vmatprep.subr.bf16.mxu0 0
        %1169 = vmatpush1.bf16.msra.mxu0 %v618
        %1170 = vmatprep.subr.bf16.mxu0 0
        %1171 = vmatpush1.bf16.msra.mxu0 %v621
        %1172 = vmatprep.subr.bf16.mxu0 0
        %1173 = vmatpush1.bf16.msra.mxu0 0
        %1174 = vmatprep.subr.bf16.mxu0 0
        %1175 = vmatpush1.bf16.msra.mxu0 0
        %1176 = vmatprep.subr.bf16.mxu0 0
        %1177 = vmatpush1.bf16.msra.mxu0 0
        %1178 = vmatprep.subr.bf16.mxu0 0
        %1179 = vmatpush1.bf16.msra.mxu0 0
        %1180 = vmatprep.subr.bf16.mxu0 0
        %1181 = vmatpush1.bf16.msra.mxu0 0
        %1182 = vmatprep.subr.bf16.mxu0 0
        %1183 = vmatpush1.bf16.msra.mxu0 0
        %1184 = vmatprep.subr.bf16.mxu0 0
        %1185 = vmatpush1.bf16.msra.mxu0 0
        %1186 = vmatprep.subr.bf16.mxu0 0
        %1187 = vmatpush1.bf16.msra.mxu0 0
        %1188 = vmatprep.mubr.bf16.mxu0 0
        %1189 = vmatmul.mubr.bf16.gmra.mrb[0].mxu0 %v1114
        %v1190 = vpop.f32.mrb[0].mxu0
        %v1191 = vadd.f32 0.0, %v1190
        %v1192 = vpop.f32.mrb[0].mxu0
        %v1193 = vpop.f32.mrb[0].mxu0
        %v1194 = vpop.f32.mrb[0].mxu0
        %1195 = vdwg.mxu0
        %v1196 = vadd.f32 %v1111, %v1150
        %v1197 = vxor.u32 %v1196, 2147483648
        %v1198 = vmul.f32 %v1197, 1.442695
        %v1199 = vpow.pop %v1198
        %v1200 = vadd.f32 %v1199, 1.0
        %v1201 = vrcp.pop %v1200
        %v1202 = vmul.f32 1.0, %v1201
        %v1203 = vadd.f32 %v1112, %v1152
        %v1204 = vxor.u32 %v1203, 2147483648
        %v1205 = vmul.f32 %v1204, 1.442695
        %v1206 = vpow.pop %v1205
        %v1207 = vadd.f32 %v1206, 1.0
        %v1208 = vrcp.pop %v1207
        %v1209 = vmul.f32 1.0, %v1208
        %v1210 = vadd.f32 %v1191, %v745
        %v1211 = vmul.f32 %v1202, %v1210
        %v1212 = vadd.f32 %v1113, %v1211
        %v1213 = vtanh.pop %v1212
        %v1214 = vsub.f32 1.0, %v1209
        %v1215 = vmul.f32 %v1214, %v1213
        %v1216 = vmul.f32 %v1209, %v1107
        %v1217 = vadd.f32 %v1215, %v1216
        %s1218 = sadd.s32 %s509, 4
        %p1219 = scmp.lt.s32.totalorder %s1218, 16
        %s1220 = scalar_select %p1219, 1, 0
        %v1221 = vstv %s1220
        %vm1222 = vcmp.eq.s32.totalorder %v1221, 1
        %v1223 = vsel %vm1222, %v1217, %v1107
        %s1224 = smul.u32 5, 3
        %s1225 = smul.addr %s1224, 8
        %s1226 = scalar_lea.vmem [#allocation2], %s1225
        %v1227 = vld [vmem:[%s1226] sm:$0xff]
        %v1228 = vld [vmem:[%s1226 + $0x8] sm:$0xff]
        %v1229 = vld [vmem:[%s1226 + $0x10] sm:$0xff]
        %v1230 = vpack.c.bf16 %v1223, %v1223
        %1231 = vmatprep.subr.bf16.mxu0 %v599
        %1232 = vmatpush1.bf16.msra.mxu0 %v598
        %1233 = vmatprep.subr.bf16.mxu0 %v602
        %1234 = vmatpush1.bf16.msra.mxu0 %v601
        %1235 = vmatprep.subr.bf16.mxu0 %v605
        %1236 = vmatpush1.bf16.msra.mxu0 %v604
        %1237 = vmatprep.subr.bf16.mxu0 %v608
        %1238 = vmatpush1.bf16.msra.mxu0 %v607
        %1239 = vmatprep.subr.bf16.mxu0 %v611
        %1240 = vmatpush1.bf16.msra.mxu0 %v610
        %1241 = vmatprep.subr.bf16.mxu0 %v614
        %1242 = vmatpush1.bf16.msra.mxu0 %v613
        %1243 = vmatprep.subr.bf16.mxu0 %v617
        %1244 = vmatpush1.bf16.msra.mxu0 %v616
        %1245 = vmatprep.subr.bf16.mxu0 %v620
        %1246 = vmatpush1.bf16.msra.mxu0 %v619
        %1247 = vmatprep.subr.bf16.mxu0 0
        %1248 = vmatpush1.bf16.msra.mxu0 0
        %1249 = vmatprep.subr.bf16.mxu0 0
        %1250 = vmatpush1.bf16.msra.mxu0 0
        %1251 = vmatprep.subr.bf16.mxu0 0
        %1252 = vmatpush1.bf16.msra.mxu0 0
        %1253 = vmatprep.subr.bf16.mxu0 0
        %1254 = vmatpush1.bf16.msra.mxu0 0
        %1255 = vmatprep.subr.bf16.mxu0 0
        %1256 = vmatpush1.bf16.msra.mxu0 0
        %1257 = vmatprep.subr.bf16.mxu0 0
        %1258 = vmatpush1.bf16.msra.mxu0 0
        %1259 = vmatprep.subr.bf16.mxu0 0
        %1260 = vmatpush1.bf16.msra.mxu0 0
        %1261 = vmatprep.subr.bf16.mxu0 0
        %1262 = vmatpush1.bf16.msra.mxu0 0
        %1263 = vmatprep.mubr.bf16.mxu0 0
        %1264 = vmatmul.mubr.bf16.gmra.mrb[0].mxu0 %v1230
        %v1265 = vpop.f32.mrb[0].mxu0
        %v1266 = vadd.f32 0.0, %v1265
        %v1267 = vpop.f32.mrb[0].mxu0
        %v1268 = vadd.f32 0.0, %v1267
        %v1269 = vpop.f32.mrb[0].mxu0
        %v1270 = vpop.f32.mrb[0].mxu0
        %1271 = vdwg.mxu0
        %1272 = vmatprep.subr.bf16.mxu0 0
        %1273 = vmatpush1.bf16.msra.mxu0 %v600
        %1274 = vmatprep.subr.bf16.mxu0 0
        %1275 = vmatpush1.bf16.msra.mxu0 %v603
        %1276 = vmatprep.subr.bf16.mxu0 0
        %1277 = vmatpush1.bf16.msra.mxu0 %v606
        %1278 = vmatprep.subr.bf16.mxu0 0
        %1279 = vmatpush1.bf16.msra.mxu0 %v609
        %1280 = vmatprep.subr.bf16.mxu0 0
        %1281 = vmatpush1.bf16.msra.mxu0 %v612
        %1282 = vmatprep.subr.bf16.mxu0 0
        %1283 = vmatpush1.bf16.msra.mxu0 %v615
        %1284 = vmatprep.subr.bf16.mxu0 0
        %1285 = vmatpush1.bf16.msra.mxu0 %v618
        %1286 = vmatprep.subr.bf16.mxu0 0
        %1287 = vmatpush1.bf16.msra.mxu0 %v621
        %1288 = vmatprep.subr.bf16.mxu0 0
        %1289 = vmatpush1.bf16.msra.mxu0 0
        %1290 = vmatprep.subr.bf16.mxu0 0
        %1291 = vmatpush1.bf16.msra.mxu0 0
        %1292 = vmatprep.subr.bf16.mxu0 0
        %1293 = vmatpush1.bf16.msra.mxu0 0
        %1294 = vmatprep.subr.bf16.mxu0 0
        %1295 = vmatpush1.bf16.msra.mxu0 0
        %1296 = vmatprep.subr.bf16.mxu0 0
        %1297 = vmatpush1.bf16.msra.mxu0 0
        %1298 = vmatprep.subr.bf16.mxu0 0
        %1299 = vmatpush1.bf16.msra.mxu0 0
        %1300 = vmatprep.subr.bf16.mxu0 0
        %1301 = vmatpush1.bf16.msra.mxu0 0
        %1302 = vmatprep.subr.bf16.mxu0 0
        %1303 = vmatpush1.bf16.msra.mxu0 0
        %1304 = vmatprep.mubr.bf16.mxu0 0
        %1305 = vmatmul.mubr.bf16.gmra.mrb[0].mxu0 %v1230
        %v1306 = vpop.f32.mrb[0].mxu0
        %v1307 = vadd.f32 0.0, %v1306
        %v1308 = vpop.f32.mrb[0].mxu0
        %v1309 = vpop.f32.mrb[0].mxu0
        %v1310 = vpop.f32.mrb[0].mxu0
        %1311 = vdwg.mxu0
        %v1312 = vadd.f32 %v1227, %v1266
        %v1313 = vxor.u32 %v1312, 2147483648
        %v1314 = vmul.f32 %v1313, 1.442695
        %v1315 = vpow.pop %v1314
        %v1316 = vadd.f32 %v1315, 1.0
        %v1317 = vrcp.pop %v1316
        %v1318 = vmul.f32 1.0, %v1317
        %v1319 = vadd.f32 %v1228, %v1268
        %v1320 = vxor.u32 %v1319, 2147483648
        %v1321 = vmul.f32 %v1320, 1.442695
        %v1322 = vpow.pop %v1321
        %v1323 = vadd.f32 %v1322, 1.0
        %v1324 = vrcp.pop %v1323
        %v1325 = vmul.f32 1.0, %v1324
        %v1326 = vadd.f32 %v1307, %v745
        %v1327 = vmul.f32 %v1318, %v1326
        %v1328 = vadd.f32 %v1229, %v1327
        %v1329 = vtanh.pop %v1328
        %v1330 = vsub.f32 1.0, %v1325
        %v1331 = vmul.f32 %v1330, %v1329
        %v1332 = vmul.f32 %v1325, %v1223
        %v1333 = vadd.f32 %v1331, %v1332
        %s1334 = sadd.s32 %s509, 5
        %p1335 = scmp.lt.s32.totalorder %s1334, 16
        %s1336 = scalar_select %p1335, 1, 0
        %v1337 = vstv %s1336
        %vm1338 = vcmp.eq.s32.totalorder %v1337, 1
        %v1339 = vsel %vm1338, %v1333, %v1223
        %1340 = vst [vmem:[#allocation6] sm:$0xff] %v1339
        // Predicated region
        $region49: #{tpu_custom_call.1} parent=39 // pred_check
          %p1341 = pneg %p160
        $region50: #{tpu_custom_call.1} parent=39 // pred_check_branch
          %1343 = sbr.rel (%p1341) target = $region52
        $region51: #{tpu_custom_call.1} parent=39 // pred_region
          %s1345 = ssub.s32 128, 128
          %1346 = vsyncadd [#allocation5], %s1345
          %s1347 = smul.addr %s22, 128
          %s1348 = scalar_lea.hbm %s5, %s1347
          %s1350 = sshll.u32 [#allocation6], 4
          %s1351 = int_to_ptr.vmem [resolvable:$true] %s1350
          %1353 = dma.vmem_to_hbm [thread:$0]  %s1351, 128, %s1348, [#allocation5]
        $region52: #{tpu_custom_call.1} parent=39 // pred_fallthru
          _
        // Predicated region
        $region53: #{tpu_custom_call.1} parent=39 // pred_check
          %p1354 = pneg %p160
        $region54: #{tpu_custom_call.1} parent=39 // pred_check_branch
          %1356 = sbr.rel (%p1354) target = $region56
        $region55: #{tpu_custom_call.1} parent=39 // pred_region
          %1357 = dma.done [#allocation5], 128
        $region56: #{tpu_custom_call.1} parent=39 // pred_fallthru
          _
      $region40: #{tpu_custom_call.1} parent=5 // pred_fallthru
        _
      %p1358 = scmp.le.s32.totalorder 2, %s13
      // Predicated region
      $region57: #{tpu_custom_call.1} parent=5 // pred_check
        %p1359 = pneg %p1358
      $region58: #{tpu_custom_call.1} parent=5 // pred_check_branch
        %1361 = sbr.rel (%p1359) target = $region60
      $region59: #{tpu_custom_call.1} parent=5 // pred_region
        %s1362 = ssub.s32 %s13, 2
      $region60: #{tpu_custom_call.1} parent=5 // pred_fallthru
        _
    $region6: #{tpu_custom_call.1} parent=1 // loop_footer
      %s17 = sadd.s32 1, %s13
    $region7: #{tpu_custom_call.1} parent=1 // loop_footer_branch
      %12 = sbr.rel target = $region3
    $region8: #{tpu_custom_call.1} parent=1 // loop_exit
      _
    %1363 = vsyncpa [#allocation4], 1
    %s1364 = scalar_lea.sflag [#allocation4], 1
    %1365 = vsyncpa %s1364, 1
    %1366 = vsyncpa [#allocation5], 1
    %s1367 = scalar_lea.sflag [#allocation5], 1
    %1368 = vsyncpa %s1367, 1

</llo_original>
